<compile_context>
chip_gen: v7x
topology: tpu7x:2x2x1
jax: 0.10.0
libtpu: 0.0.40
codegen_flags: <defaults>
</compile_context>

<pallas_src>
import functools

import jax
import jax.numpy as jnp
from jax.experimental import pallas as pl
from jax.experimental.pallas import tpu as pltpu

EPS = 1e-5
HEAD_PAD = 128           # lane-dense fused head width (adv lane 0, aux lanes 1..n_classes)
FEAT_DIMS = (64, 128, 256, 512)


# ----------------------------------------------------------------------------
# shared in-kernel helpers
# ----------------------------------------------------------------------------
def _heads_from_z(z, n_classes):
    """z: (B, HEAD_PAD) f32 fused-head logits -> (adv (B,1), aux (B,n_classes))."""
    # adv: numerically stable sigmoid of lane 0 only (no HEAD_PAD-wide exp).
    z0 = z[:, 0:1]
    ez = jnp.exp(-jnp.abs(z0))
    inv = 1.0 / (1.0 + ez)
    adv = jnp.where(z0 >= 0.0, inv, ez * inv)
    # aux: masked softmax over lanes 1..n_classes of the zero-padded head.
    lane = jax.lax.broadcasted_iota(jnp.int32, z.shape, dimension=1)
    is_aux = (lane >= 1) & (lane < 1 + n_classes)
    logits = jnp.where(is_aux, z, jnp.float32(-1e30))
    m = jnp.max(logits, axis=-1, keepdims=True)
    e = jnp.where(is_aux, jnp.exp(logits - m), 0.0)
    soft = e / jnp.sum(e, axis=-1, keepdims=True)
    return adv, soft[:, 1:1 + n_classes]


# ----------------------------------------------------------------------------
# whole-batch (grid-less) kernel — small B, everything resident in VMEM
# ----------------------------------------------------------------------------
def _whole_batch_kernel(x_ref,
                        w1_ref, b1_ref, g1_ref, be1_ref,
                        w2_ref, b2_ref, g2_ref, be2_ref,
                        w3_ref, b3_ref, g3_ref, be3_ref,
                        w4_ref, b4_ref, whead_ref, bhead_ref,
                        f_ref, adv_ref, aux_ref, *, n_classes):
    x = x_ref[...]                      # already bf16 (cast in the wrapper)

    def lin_relu_bn(h_bf16, w_r, b_r, g_r, be_r):
        y = jnp.dot(h_bf16, w_r[...], preferred_element_type=jnp.float32) + b_r[...]
        y = jnp.maximum(y, 0.0)
        # training-mode BatchNorm1d, centered (two-pass) variance in f32,
        # affine folded into a single fused scale + shift.
        mu = jnp.mean(y, axis=0, keepdims=True)
        yc = y - mu
        var = jnp.mean(yc * yc, axis=0, keepdims=True)
        scale = g_r[...] * jax.lax.rsqrt(var + EPS)
        return (yc * scale + be_r[...]).astype(jnp.bfloat16)

    h = lin_relu_bn(x, w1_ref, b1_ref, g1_ref, be1_ref)
    h = lin_relu_bn(h, w2_ref, b2_ref, g2_ref, be2_ref)
    h = lin_relu_bn(h, w3_ref, b3_ref, g3_ref, be3_ref)

    # final feat layer: Linear(256,512) -> ReLU (no BN)
    f = jnp.dot(h, w4_ref[...], preferred_element_type=jnp.float32) + b4_ref[...]
    f = jnp.maximum(f, 0.0)
    f_ref[...] = f.astype(f_ref.dtype)

    # fused lane-dense (512,128) head matmul; only narrow adv/aux stores leave VMEM.
    z = jnp.dot(f.astype(jnp.bfloat16), whead_ref[...],
                preferred_element_type=jnp.float32) + bhead_ref[...]
    adv, aux = _heads_from_z(z, n_classes)
    adv_ref[...] = adv
    aux_ref[...] = aux


# ----------------------------------------------------------------------------
# batch-tiled two-sweep-BN kernels — large B / v7x path
# ----------------------------------------------------------------------------
def _stats_layer_kernel(h_ref, scale_ref, shift_ref, w_ref, b_ref,
                        hout_ref, sum_ref, sumsq_ref,
                        *, tile_b, b_true, b_pad):
    """Apply previous BN (fused scale/shift), Linear + ReLU; write pre-BN bf16
    activations and accumulate per-feature sum / sum-of-squares over batch tiles."""
    i = pl.program_id(0)

    @pl.when(i == 0)
    def _init():
        sum_ref[...] = jnp.zeros_like(sum_ref)
        sumsq_ref[...] = jnp.zeros_like(sumsq_ref)

    hn = h_ref[...].astype(jnp.float32) * scale_ref[...] + shift_ref[...]
    y = jnp.dot(hn.astype(jnp.bfloat16), w_ref[...],
                preferred_element_type=jnp.float32) + b_ref[...]
    y = jnp.maximum(y, 0.0)
    yb = y.astype(jnp.bfloat16)
    hout_ref[...] = yb

    yf = yb.astype(jnp.float32)         # stats on exactly the values BN will see
    if b_pad != b_true:                 # static: only emitted when batch was padded
        row = i * tile_b + jax.lax.broadcasted_iota(jnp.int32, yf.shape, 0)
        yf = jnp.where(row < b_true, yf, 0.0)
    sum_ref[...] += jnp.sum(yf, axis=0, keepdims=True)
    sumsq_ref[...] += jnp.sum(yf * yf, axis=0, keepdims=True)


def _final_layer_kernel(h_ref, scale_ref, shift_ref, w4_ref, b4_ref,
                        whead_ref, bhead_ref,
                        f_ref, adv_ref, aux_ref, *, n_classes):
    """BN3 (fused scale/shift) -> Linear(256,512) -> ReLU -> fused adv/aux heads."""
    hn = h_ref[...].astype(jnp.float32) * scale_ref[...] + shift_ref[...]
    f = jnp.dot(hn.astype(jnp.bfloat16), w4_ref[...],
                preferred_element_type=jnp.float32) + b4_ref[...]
    f = jnp.maximum(f, 0.0)
    f_ref[...] = f.astype(f_ref.dtype)
    z = jnp.dot(f.astype(jnp.bfloat16), whead_ref[...],
                preferred_element_type=jnp.float32) + bhead_ref[...]
    adv, aux = _heads_from_z(z, n_classes)
    adv_ref[...] = adv
    aux_ref[...] = aux


# ----------------------------------------------------------------------------
# parameters
# ----------------------------------------------------------------------------
def make_params(key, data_dim, n_classes):
    """Weights in bf16 (MXU operands); biases / BN affine params in f32."""
    assert 1 + n_classes <= HEAD_PAD
    dims = (data_dim,) + FEAT_DIMS
    keys = jax.random.split(key, 6)
    params = {}
    for li in range(4):
        fan_in, fan_out = dims[li], dims[li + 1]
        w = (jax.random.normal(keys[li], (fan_in, fan_out), jnp.float32)
             / jnp.sqrt(fan_in)).astype(jnp.bfloat16)
        params[f"w{li + 1}"] = w
        params[f"b{li + 1}"] = jnp.zeros((1, fan_out), jnp.float32)
        if li < 3:
            # BatchNorm1d affine params, PyTorch default init (gamma=1, beta=0)
            params[f"g{li + 1}"] = jnp.ones((1, fan_out), jnp.float32)
            params[f"be{li + 1}"] = jnp.zeros((1, fan_out), jnp.float32)
    # fused adv/aux head, zero-padded to 128 lanes (lane 0 adv, lanes 1..nc aux)
    wadv = jax.random.normal(keys[4], (512, 1), jnp.float32) / jnp.sqrt(512.0)
    waux = jax.random.normal(keys[5], (512, n_classes), jnp.float32) / jnp.sqrt(512.0)
    whead = jnp.zeros((512, HEAD_PAD), jnp.float32)
    whead = whead.at[:, 0:1].set(wadv).at[:, 1:1 + n_classes].set(waux)
    params["whead"] = whead.astype(jnp.bfloat16)
    params["bhead"] = jnp.zeros((1, HEAD_PAD), jnp.float32)
    return params


def _param_bytes(params):
    return sum(int(p.size) * p.dtype.itemsize for p in params.values())


def _vmem_cap_bytes():
    """Generation-aware scoped-VMEM ceiling: 3/4 of physical VMEM
    (~96 MiB on 128 MiB parts v5e/v6e, ~48 MiB on 64 MiB v7x)."""
    cap = None
    try:
        cap = getattr(pltpu.get_tpu_info(), "vmem_capacity_bytes", None)
    except Exception:
        cap = None
    if not cap:
        cap = 64 << 20       # conservative fallback (v7x-sized)
    return int(cap) * 3 // 4


# ----------------------------------------------------------------------------
# wrappers
# ----------------------------------------------------------------------------
def _forward_whole_batch(x_bf16, params, n_classes, f_dtype, vmem_limit):
    B, d = x_bf16.shape
    order = ["w1", "b1", "g1", "be1", "w2", "b2", "g2", "be2",
             "w3", "b3", "g3", "be3", "w4", "b4", "whead", "bhead"]
    args = [x_bf16] + [params[k] for k in order]
    vmem = pl.BlockSpec(memory_space=pltpu.MemorySpace.VMEM)

    flops = 2 * B * (d * 64 + 64 * 128 + 128 * 256 + 256 * 512 + 512 * HEAD_PAD)
    f_bytes = jnp.dtype(f_dtype).itemsize
    bytes_accessed = (B * d * 2 + _param_bytes(params)
                      + B * 512 * f_bytes + B * (1 + n_classes) * 4)
    transcendentals = (64 + 128 + 256) + B * (HEAD_PAD + 1)

    out_shape = (
        jax.ShapeDtypeStruct((B, 512), f_dtype),          # f
        jax.ShapeDtypeStruct((B, 1), jnp.float32),        # adv
        jax.ShapeDtypeStruct((B, n_classes), jnp.float32) # aux
    )
    fn = pl.pallas_call(
        functools.partial(_whole_batch_kernel, n_classes=n_classes),
        out_shape=out_shape,
        in_specs=[vmem] * len(args),
        out_specs=(vmem, vmem, vmem),
        compiler_params=pltpu.CompilerParams(vmem_limit_bytes=vmem_limit),
        cost_estimate=pl.CostEstimate(flops=flops,
                                      transcendentals=transcendentals,
                                      bytes_accessed=bytes_accessed),
    )
    f, adv, aux = fn(*args)
    return adv, aux, f


def _stats_sweep(h_in, scale, shift, w, b, *, tile_b, b_true, vmem_limit):
    b_pad, d_in = h_in.shape
    n_out = w.shape[1]
    grid = (b_pad // tile_b,)
    kern = functools.partial(_stats_layer_kernel, tile_b=tile_b,
                             b_true=b_true, b_pad=b_pad)
    h_out, ssum, ssq = pl.pallas_call(
        kern,
        grid=grid,
        in_specs=[
            pl.BlockSpec((tile_b, d_in), lambda i: (i, 0)),
            pl.BlockSpec((1, d_in), lambda i: (0, 0)),          # fused BN scale
            pl.BlockSpec((1, d_in), lambda i: (0, 0)),          # fused BN shift
            pl.BlockSpec((d_in, n_out), lambda i: (0, 0)),      # weights stay VMEM-resident
            pl.BlockSpec((1, n_out), lambda i: (0, 0)),
        ],
        out_specs=(
            pl.BlockSpec((tile_b, n_out), lambda i: (i, 0)),    # pre-BN activations (bf16)
            pl.BlockSpec((1, n_out), lambda i: (0, 0)),         # batch-sum accumulator
            pl.BlockSpec((1, n_out), lambda i: (0, 0)),         # batch-sumsq accumulator
        ),
        out_shape=(
            jax.ShapeDtypeStruct((b_pad, n_out), jnp.bfloat16),
            jax.ShapeDtypeStruct((1, n_out), jnp.float32),
            jax.ShapeDtypeStruct((1, n_out), jnp.float32),
        ),
        compiler_params=pltpu.CompilerParams(
            dimension_semantics=("arbitrary",),   # batch axis is a reduction here
            vmem_limit_bytes=vmem_limit),
    )(h_in, scale, shift, w, b)
    return h_out, ssum, ssq


def _final_sweep(h_in, scale, shift, w4, b4, whead, bhead,
                 *, tile_b, n_classes, f_dtype, vmem_limit):
    b_pad, d_in = h_in.shape
    grid = (b_pad // tile_b,)
    kern = functools.partial(_final_layer_kernel, n_classes=n_classes)
    f, adv, aux = pl.pallas_call(
        kern,
        grid=grid,
        in_specs=[
            pl.BlockSpec((tile_b, d_in), lambda i: (i, 0)),
            pl.BlockSpec((1, d_in), lambda i: (0, 0)),
            pl.BlockSpec((1, d_in), lambda i: (0, 0)),
            pl.BlockSpec((d_in, 512), lambda i: (0, 0)),
            pl.BlockSpec((1, 512), lambda i: (0, 0)),
            pl.BlockSpec((512, HEAD_PAD), lambda i: (0, 0)),
            pl.BlockSpec((1, HEAD_PAD), lambda i: (0, 0)),
        ],
        out_specs=(
            pl.BlockSpec((tile_b, 512), lambda i: (i, 0)),
            pl.BlockSpec((tile_b, 1), lambda i: (i, 0)),
            pl.BlockSpec((tile_b, n_classes), lambda i: (i, 0)),
        ),
        out_shape=(
            jax.ShapeDtypeStruct((b_pad, 512), f_dtype),
            jax.ShapeDtypeStruct((b_pad, 1), jnp.float32),
            jax.ShapeDtypeStruct((b_pad, n_classes), jnp.float32),
        ),
        compiler_params=pltpu.CompilerParams(
            dimension_semantics=("parallel",),    # independent batch tiles -> megacore
            vmem_limit_bytes=vmem_limit),
    )(h_in, scale, shift, w4, b4, whead, bhead)
    return f, adv, aux


def _bn_scale_shift(ssum, ssq, gamma, beta, n):
    """Fused training-mode BN: scale = g*rsqrt(var+eps), shift = beta - mu*scale."""
    mu = ssum / n
    var = jnp.maximum(ssq / n - mu * mu, 0.0)   # one-pass biased variance (f32)
    scale = gamma * jax.lax.rsqrt(var + EPS)
    shift = beta - mu * scale
    return scale, shift


def _forward_tiled(x_bf16, params, n_classes, f_dtype, tile_b, vmem_limit):
    B, d = x_bf16.shape
    b_pad = -(-B // tile_b) * tile_b
    if b_pad != B:
        x_bf16 = jnp.pad(x_bf16, ((0, b_pad - B), (0, 0)))

    # layer 1: identity "BN" (scale=1, shift=0) applied to the bf16 input
    h, s, q = _stats_sweep(x_bf16, jnp.ones((1, d), jnp.float32),
                           jnp.zeros((1, d), jnp.float32),
                           params["w1"], params["b1"],
                           tile_b=tile_b, b_true=B, vmem_limit=vmem_limit)
    for li in (1, 2):
        sc, sh = _bn_scale_shift(s, q, params[f"g{li}"], params[f"be{li}"], B)
        h, s, q = _stats_sweep(h, sc, sh, params[f"w{li + 1}"], params[f"b{li + 1}"],
                               tile_b=tile_b, b_true=B, vmem_limit=vmem_limit)
    sc3, sh3 = _bn_scale_shift(s, q, params["g3"], params["be3"], B)
    f, adv, aux = _final_sweep(h, sc3, sh3, params["w4"], params["b4"],
                               params["whead"], params["bhead"],
                               tile_b=tile_b, n_classes=n_classes,
                               f_dtype=f_dtype, vmem_limit=vmem_limit)
    if b_pad != B:
        f, adv, aux = f[:B], adv[:B], aux[:B]
    return adv, aux, f


def discriminator_forward(x, params, n_classes, *,
                          f_dtype=jnp.bfloat16,
                          batch_tile=None,
                          force_tiled=False):
    """Returns (adv (B,1) f32, aux (B,n_classes) f32, f (B,512) f_dtype).
    Batches that are multiples of 16 avoid bf16 sublane padding waste."""
    B, d = x.shape
    x_bf16 = x.astype(jnp.bfloat16)       # halve input DMA bytes (accepted tolerance)
    cap = _vmem_cap_bytes()

    # whole-batch working-set estimate (bf16 x/f, f32 intermediates, 2x headroom)
    act_bytes = B * (2 * d + 4 * (64 + 128 + 256 + 512 + HEAD_PAD) + 2 * 512)
    whole_need = _param_bytes(params) + 2 * act_bytes + (2 << 20)

    if not force_tiled and whole_need <= cap:
        vmem_limit = int(min(max(whole_need, 8 << 20), cap))
        return _forward_whole_batch(x_bf16, params, n_classes, f_dtype, vmem_limit)

    # batch-tiled two-sweep-BN path (large B, or v7x's smaller VMEM)
    if batch_tile is None:
        batch_tile = 512
    tile_b = max(16, -(-int(batch_tile) // 16) * 16)       # multiple of 16
    tile_b = min(tile_b, max(16, -(-B // 16) * 16))         # don't over-pad tiny batches
    return _forward_tiled(x_bf16, params, n_classes, f_dtype, tile_b, cap)


# ----------------------------------------------------------------------------
# demo / self-test
# ----------------------------------------------------------------------------
if __name__ == "__main__":
    # Small deterministic example consistent with the module:
    #   opt.data_dim = 32, opt.n_classes = 4, batch = 32 (multiple of 16)
    DATA_DIM = 32
    N_CLASSES = 4
    BATCH = 32

    key = jax.random.PRNGKey(0)
    kx, kp = jax.random.split(key)
    x = jax.random.normal(kx, (BATCH, DATA_DIM), jnp.float32)
    params = make_params(kp, DATA_DIM, N_CLASSES)

    def check(adv, aux, f):
        assert adv.shape == (BATCH, 1) and adv.dtype == jnp.float32
        assert aux.shape == (BATCH, N_CLASSES) and aux.dtype == jnp.float32
        assert f.shape == (BATCH, 512)
        f32 = f.astype(jnp.float32)
        assert bool(jnp.all(jnp.isfinite(adv))) and bool(jnp.all(jnp.isfinite(aux)))
        assert bool(jnp.all(jnp.isfinite(f32)))
        assert bool(jnp.all((adv > 0.0) & (adv < 1.0)))
        assert bool(jnp.allclose(jnp.sum(aux, axis=1), 1.0, atol=1e-5))

    # 1) whole-batch single-invocation path (small B, fits VMEM)
    adv, aux, f = discriminator_forward(x, params, N_CLASSES)
    jax.block_until_ready((adv, aux, f))
    check(adv, aux, f)

    # 2) batch-tiled two-sweep-BN path (the large-B / v7x path), forced with a tiny
    #    tile so the grid + stats-accumulator machinery is actually exercised.
    adv_t, aux_t, f_t = discriminator_forward(x, params, N_CLASSES,
                                              force_tiled=True, batch_tile=16)
    jax.block_until_ready((adv_t, aux_t, f_t))
    check(adv_t, aux_t, f_t)

    # The two paths differ only by bf16 rounding of the HBM-staged activations.
    assert float(jnp.max(jnp.abs(adv - adv_t))) < 5e-2
    assert float(jnp.max(jnp.abs(aux - aux_t))) < 5e-2
    assert float(jnp.max(jnp.abs(f.astype(jnp.float32)
                                 - f_t.astype(jnp.float32)))) < 0.5

    print("KERNEL_OK")
</pallas_src>

<mosaic_0001>
module attributes {stable_mosaic.version = 11 : i64} {
  func.func @_whole_batch_kernel(%arg0: memref<32x32xbf16, #tpu.memory_space<vmem>>, %arg1: memref<32x64xbf16, #tpu.memory_space<vmem>>, %arg2: memref<1x64xf32, #tpu.memory_space<vmem>>, %arg3: memref<1x64xf32, #tpu.memory_space<vmem>>, %arg4: memref<1x64xf32, #tpu.memory_space<vmem>>, %arg5: memref<64x128xbf16, #tpu.memory_space<vmem>>, %arg6: memref<1x128xf32, #tpu.memory_space<vmem>>, %arg7: memref<1x128xf32, #tpu.memory_space<vmem>>, %arg8: memref<1x128xf32, #tpu.memory_space<vmem>>, %arg9: memref<128x256xbf16, #tpu.memory_space<vmem>>, %arg10: memref<1x256xf32, #tpu.memory_space<vmem>>, %arg11: memref<1x256xf32, #tpu.memory_space<vmem>>, %arg12: memref<1x256xf32, #tpu.memory_space<vmem>>, %arg13: memref<256x512xbf16, #tpu.memory_space<vmem>>, %arg14: memref<1x512xf32, #tpu.memory_space<vmem>>, %arg15: memref<512x128xbf16, #tpu.memory_space<vmem>>, %arg16: memref<1x128xf32, #tpu.memory_space<vmem>>, %arg17: memref<32x512xbf16, #tpu.memory_space<vmem>>, %arg18: memref<32x1xf32, #tpu.memory_space<vmem>>, %arg19: memref<32x4xf32, #tpu.memory_space<vmem>>) attributes {dimension_semantics = [], scalar_prefetch = 0 : i64, scratch_operands = 0 : i64, tpu.core_type = #tpu.core_type<tc>} {
    %c0 = arith.constant 0 : index
    %c0_0 = arith.constant 0 : index
    %0 = vector.load %arg0[%c0, %c0_0] : memref<32x32xbf16, #tpu.memory_space<vmem>>, vector<32x32xbf16>
    %c0_1 = arith.constant 0 : index
    %c0_2 = arith.constant 0 : index
    %1 = vector.load %arg1[%c0_1, %c0_2] : memref<32x64xbf16, #tpu.memory_space<vmem>>, vector<32x64xbf16>
    %cst = arith.constant dense<0.000000e+00> : vector<32x64xf32>
    %2 = tpu.matmul %0, %1, %cst {dimension_numbers = #tpu.dot_dimension_numbers<[1], [0], [0], [1], [0, 0, 1, 1], [], []>} : vector<32x32xbf16>, vector<32x64xbf16>, vector<32x64xf32> -> vector<32x64xf32>
    %c0_3 = arith.constant 0 : index
    %c0_4 = arith.constant 0 : index
    %3 = vector.load %arg2[%c0_3, %c0_4] : memref<1x64xf32, #tpu.memory_space<vmem>>, vector<1x64xf32>
    %4 = vector.broadcast %3 : vector<1x64xf32> to vector<32x64xf32>
    %5 = arith.addf %2, %4 : vector<32x64xf32>
    %cst_5 = arith.constant 0.000000e+00 : f32
    %6 = vector.broadcast %cst_5 : f32 to vector<32x64xf32>
    %7 = arith.maximumf %5, %6 : vector<32x64xf32>
    %cst_6 = arith.constant dense<0.000000e+00> : vector<64xf32>
    %8 = vector.multi_reduction <add>, %7, %cst_6 [0] : vector<32x64xf32> to vector<64xf32>
    %9 = vector.shape_cast %8 : vector<64xf32> to vector<1x64xf32>
    %cst_7 = arith.constant 3.200000e+01 : f32
    %10 = vector.broadcast %cst_7 : f32 to vector<1x64xf32>
    %11 = arith.divf %9, %10 : vector<1x64xf32>
    %12 = vector.broadcast %11 : vector<1x64xf32> to vector<32x64xf32>
    %13 = arith.subf %7, %12 : vector<32x64xf32>
    %14 = arith.mulf %13, %13 : vector<32x64xf32>
    %cst_8 = arith.constant dense<0.000000e+00> : vector<64xf32>
    %15 = vector.multi_reduction <add>, %14, %cst_8 [0] : vector<32x64xf32> to vector<64xf32>
    %16 = vector.shape_cast %15 : vector<64xf32> to vector<1x64xf32>
    %cst_9 = arith.constant 3.200000e+01 : f32
    %17 = vector.broadcast %cst_9 : f32 to vector<1x64xf32>
    %18 = arith.divf %16, %17 : vector<1x64xf32>
    %c0_10 = arith.constant 0 : index
    %c0_11 = arith.constant 0 : index
    %19 = vector.load %arg3[%c0_10, %c0_11] : memref<1x64xf32, #tpu.memory_space<vmem>>, vector<1x64xf32>
    %cst_12 = arith.constant 9.99999974E-6 : f32
    %20 = vector.broadcast %cst_12 : f32 to vector<1x64xf32>
    %21 = arith.addf %18, %20 : vector<1x64xf32>
    %22 = math.rsqrt %21 : vector<1x64xf32>
    %23 = arith.mulf %19, %22 : vector<1x64xf32>
    %24 = vector.broadcast %23 : vector<1x64xf32> to vector<32x64xf32>
    %25 = arith.mulf %13, %24 : vector<32x64xf32>
    %c0_13 = arith.constant 0 : index
    %c0_14 = arith.constant 0 : index
    %26 = vector.load %arg4[%c0_13, %c0_14] : memref<1x64xf32, #tpu.memory_space<vmem>>, vector<1x64xf32>
    %27 = vector.broadcast %26 : vector<1x64xf32> to vector<32x64xf32>
    %28 = arith.addf %25, %27 : vector<32x64xf32>
    %29 = arith.truncf %28 : vector<32x64xf32> to vector<32x64xbf16>
    %c0_15 = arith.constant 0 : index
    %c0_16 = arith.constant 0 : index
    %30 = vector.load %arg5[%c0_15, %c0_16] : memref<64x128xbf16, #tpu.memory_space<vmem>>, vector<64x128xbf16>
    %cst_17 = arith.constant dense<0.000000e+00> : vector<32x128xf32>
    %31 = tpu.matmul %29, %30, %cst_17 {dimension_numbers = #tpu.dot_dimension_numbers<[1], [0], [0], [1], [0, 0, 1, 1], [], []>} : vector<32x64xbf16>, vector<64x128xbf16>, vector<32x128xf32> -> vector<32x128xf32>
    %c0_18 = arith.constant 0 : index
    %c0_19 = arith.constant 0 : index
    %32 = vector.load %arg6[%c0_18, %c0_19] : memref<1x128xf32, #tpu.memory_space<vmem>>, vector<1x128xf32>
    %33 = vector.broadcast %32 : vector<1x128xf32> to vector<32x128xf32>
    %34 = arith.addf %31, %33 : vector<32x128xf32>
    %cst_20 = arith.constant 0.000000e+00 : f32
    %35 = vector.broadcast %cst_20 : f32 to vector<32x128xf32>
    %36 = arith.maximumf %34, %35 : vector<32x128xf32>
    %cst_21 = arith.constant dense<0.000000e+00> : vector<128xf32>
    %37 = vector.multi_reduction <add>, %36, %cst_21 [0] : vector<32x128xf32> to vector<128xf32>
    %38 = vector.shape_cast %37 : vector<128xf32> to vector<1x128xf32>
    %cst_22 = arith.constant 3.200000e+01 : f32
    %39 = vector.broadcast %cst_22 : f32 to vector<1x128xf32>
    %40 = arith.divf %38, %39 : vector<1x128xf32>
    %41 = vector.broadcast %40 : vector<1x128xf32> to vector<32x128xf32>
    %42 = arith.subf %36, %41 : vector<32x128xf32>
    %43 = arith.mulf %42, %42 : vector<32x128xf32>
    %cst_23 = arith.constant dense<0.000000e+00> : vector<128xf32>
    %44 = vector.multi_reduction <add>, %43, %cst_23 [0] : vector<32x128xf32> to vector<128xf32>
    %45 = vector.shape_cast %44 : vector<128xf32> to vector<1x128xf32>
    %cst_24 = arith.constant 3.200000e+01 : f32
    %46 = vector.broadcast %cst_24 : f32 to vector<1x128xf32>
    %47 = arith.divf %45, %46 : vector<1x128xf32>
    %c0_25 = arith.constant 0 : index
    %c0_26 = arith.constant 0 : index
    %48 = vector.load %arg7[%c0_25, %c0_26] : memref<1x128xf32, #tpu.memory_space<vmem>>, vector<1x128xf32>
    %cst_27 = arith.constant 9.99999974E-6 : f32
    %49 = vector.broadcast %cst_27 : f32 to vector<1x128xf32>
    %50 = arith.addf %47, %49 : vector<1x128xf32>
    %51 = math.rsqrt %50 : vector<1x128xf32>
    %52 = arith.mulf %48, %51 : vector<1x128xf32>
    %53 = vector.broadcast %52 : vector<1x128xf32> to vector<32x128xf32>
    %54 = arith.mulf %42, %53 : vector<32x128xf32>
    %c0_28 = arith.constant 0 : index
    %c0_29 = arith.constant 0 : index
    %55 = vector.load %arg8[%c0_28, %c0_29] : memref<1x128xf32, #tpu.memory_space<vmem>>, vector<1x128xf32>
    %56 = vector.broadcast %55 : vector<1x128xf32> to vector<32x128xf32>
    %57 = arith.addf %54, %56 : vector<32x128xf32>
    %58 = arith.truncf %57 : vector<32x128xf32> to vector<32x128xbf16>
    %c0_30 = arith.constant 0 : index
    %c0_31 = arith.constant 0 : index
    %59 = vector.load %arg9[%c0_30, %c0_31] : memref<128x256xbf16, #tpu.memory_space<vmem>>, vector<128x256xbf16>
    %cst_32 = arith.constant dense<0.000000e+00> : vector<32x256xf32>
    %60 = tpu.matmul %58, %59, %cst_32 {dimension_numbers = #tpu.dot_dimension_numbers<[1], [0], [0], [1], [0, 0, 1, 1], [], []>} : vector<32x128xbf16>, vector<128x256xbf16>, vector<32x256xf32> -> vector<32x256xf32>
    %c0_33 = arith.constant 0 : index
    %c0_34 = arith.constant 0 : index
    %61 = vector.load %arg10[%c0_33, %c0_34] : memref<1x256xf32, #tpu.memory_space<vmem>>, vector<1x256xf32>
    %62 = vector.broadcast %61 : vector<1x256xf32> to vector<32x256xf32>
    %63 = arith.addf %60, %62 : vector<32x256xf32>
    %cst_35 = arith.constant 0.000000e+00 : f32
    %64 = vector.broadcast %cst_35 : f32 to vector<32x256xf32>
    %65 = arith.maximumf %63, %64 : vector<32x256xf32>
    %cst_36 = arith.constant dense<0.000000e+00> : vector<256xf32>
    %66 = vector.multi_reduction <add>, %65, %cst_36 [0] : vector<32x256xf32> to vector<256xf32>
    %67 = vector.shape_cast %66 : vector<256xf32> to vector<1x256xf32>
    %cst_37 = arith.constant 3.200000e+01 : f32
    %68 = vector.broadcast %cst_37 : f32 to vector<1x256xf32>
    %69 = arith.divf %67, %68 : vector<1x256xf32>
    %70 = vector.broadcast %69 : vector<1x256xf32> to vector<32x256xf32>
    %71 = arith.subf %65, %70 : vector<32x256xf32>
    %72 = arith.mulf %71, %71 : vector<32x256xf32>
    %cst_38 = arith.constant dense<0.000000e+00> : vector<256xf32>
    %73 = vector.multi_reduction <add>, %72, %cst_38 [0] : vector<32x256xf32> to vector<256xf32>
    %74 = vector.shape_cast %73 : vector<256xf32> to vector<1x256xf32>
    %cst_39 = arith.constant 3.200000e+01 : f32
    %75 = vector.broadcast %cst_39 : f32 to vector<1x256xf32>
    %76 = arith.divf %74, %75 : vector<1x256xf32>
    %c0_40 = arith.constant 0 : index
    %c0_41 = arith.constant 0 : index
    %77 = vector.load %arg11[%c0_40, %c0_41] : memref<1x256xf32, #tpu.memory_space<vmem>>, vector<1x256xf32>
    %cst_42 = arith.constant 9.99999974E-6 : f32
    %78 = vector.broadcast %cst_42 : f32 to vector<1x256xf32>
    %79 = arith.addf %76, %78 : vector<1x256xf32>
    %80 = math.rsqrt %79 : vector<1x256xf32>
    %81 = arith.mulf %77, %80 : vector<1x256xf32>
    %82 = vector.broadcast %81 : vector<1x256xf32> to vector<32x256xf32>
    %83 = arith.mulf %71, %82 : vector<32x256xf32>
    %c0_43 = arith.constant 0 : index
    %c0_44 = arith.constant 0 : index
    %84 = vector.load %arg12[%c0_43, %c0_44] : memref<1x256xf32, #tpu.memory_space<vmem>>, vector<1x256xf32>
    %85 = vector.broadcast %84 : vector<1x256xf32> to vector<32x256xf32>
    %86 = arith.addf %83, %85 : vector<32x256xf32>
    %87 = arith.truncf %86 : vector<32x256xf32> to vector<32x256xbf16>
    %c0_45 = arith.constant 0 : index
    %c0_46 = arith.constant 0 : index
    %88 = vector.load %arg13[%c0_45, %c0_46] : memref<256x512xbf16, #tpu.memory_space<vmem>>, vector<256x512xbf16>
    %cst_47 = arith.constant dense<0.000000e+00> : vector<32x512xf32>
    %89 = tpu.matmul %87, %88, %cst_47 {dimension_numbers = #tpu.dot_dimension_numbers<[1], [0], [0], [1], [0, 0, 1, 1], [], []>} : vector<32x256xbf16>, vector<256x512xbf16>, vector<32x512xf32> -> vector<32x512xf32>
    %c0_48 = arith.constant 0 : index
    %c0_49 = arith.constant 0 : index
    %90 = vector.load %arg14[%c0_48, %c0_49] : memref<1x512xf32, #tpu.memory_space<vmem>>, vector<1x512xf32>
    %91 = vector.broadcast %90 : vector<1x512xf32> to vector<32x512xf32>
    %92 = arith.addf %89, %91 : vector<32x512xf32>
    %cst_50 = arith.constant 0.000000e+00 : f32
    %93 = vector.broadcast %cst_50 : f32 to vector<32x512xf32>
    %94 = arith.maximumf %92, %93 : vector<32x512xf32>
    %95 = arith.truncf %94 : vector<32x512xf32> to vector<32x512xbf16>
    %c0_51 = arith.constant 0 : index
    %c0_52 = arith.constant 0 : index
    %96 = vector.load %arg17[%c0_51, %c0_52] : memref<32x512xbf16, #tpu.memory_space<vmem>>, vector<32x512xbf16>
    tpu.vector_store %arg17[%c0_51, %c0_52], %95 {strides = array<i32>} : memref<32x512xbf16, #tpu.memory_space<vmem>>, vector<32x512xbf16>,
    %97 = arith.truncf %94 : vector<32x512xf32> to vector<32x512xbf16>
    %c0_53 = arith.constant 0 : index
    %c0_54 = arith.constant 0 : index
    %98 = vector.load %arg15[%c0_53, %c0_54] : memref<512x128xbf16, #tpu.memory_space<vmem>>, vector<512x128xbf16>
    %cst_55 = arith.constant dense<0.000000e+00> : vector<32x128xf32>
    %99 = tpu.matmul %97, %98, %cst_55 {dimension_numbers = #tpu.dot_dimension_numbers<[1], [0], [0], [1], [0, 0, 1, 1], [], []>} : vector<32x512xbf16>, vector<512x128xbf16>, vector<32x128xf32> -> vector<32x128xf32>
    %c0_56 = arith.constant 0 : index
    %c0_57 = arith.constant 0 : index
    %100 = vector.load %arg16[%c0_56, %c0_57] : memref<1x128xf32, #tpu.memory_space<vmem>>, vector<1x128xf32>
    %101 = vector.broadcast %100 : vector<1x128xf32> to vector<32x128xf32>
    %102 = arith.addf %99, %101 : vector<32x128xf32>
    %103 = vector.extract_strided_slice %102 {offsets = [0, 0], sizes = [32, 1], strides = [1, 1]} : vector<32x128xf32> to vector<32x1xf32>
    %104 = math.absf %103 : vector<32x1xf32>
    %cst_58 = arith.constant 0.000000e+00 : f32
    %105 = vector.broadcast %cst_58 : f32 to vector<32x1xf32>
    %106 = arith.subf %105, %104 : vector<32x1xf32>
    %107 = math.exp %106 : vector<32x1xf32>
    %cst_59 = arith.constant 1.000000e+00 : f32
    %108 = vector.broadcast %cst_59 : f32 to vector<32x1xf32>
    %109 = arith.addf %108, %107 : vector<32x1xf32>
    %cst_60 = arith.constant 1.000000e+00 : f32
    %110 = vector.broadcast %cst_60 : f32 to vector<32x1xf32>
    %111 = arith.divf %110, %109 : vector<32x1xf32>
    %cst_61 = arith.constant 0.000000e+00 : f32
    %112 = vector.broadcast %cst_61 : f32 to vector<32x1xf32>
    %113 = arith.cmpf oge, %103, %112 : vector<32x1xf32>
    %114 = arith.mulf %107, %111 : vector<32x1xf32>
    %115 = arith.select %113, %111, %114 : vector<32x1xi1>, vector<32x1xf32>
    %116 = tpu.iota {dimensions = array<i32: 1>} : vector<32x128xi32>
    %c1_i32 = arith.constant 1 : i32
    %117 = vector.broadcast %c1_i32 : i32 to vector<32x128xi32>
    %118 = arith.cmpi sge, %116, %117 : vector<32x128xi32>
    %c5_i32 = arith.constant 5 : i32
    %119 = vector.broadcast %c5_i32 : i32 to vector<32x128xi32>
    %120 = arith.cmpi slt, %116, %119 : vector<32x128xi32>
    %121 = arith.andi %118, %120 : vector<32x128xi1>
    %cst_62 = arith.constant -1.000000e+30 : f32
    %122 = vector.broadcast %cst_62 : f32 to vector<32x128xf32>
    %123 = arith.select %121, %102, %122 : vector<32x128xi1>, vector<32x128xf32>
    %cst_63 = arith.constant dense<0xFF800000> : vector<32xf32>
    %124 = vector.multi_reduction <maximumf>, %123, %cst_63 [1] : vector<32x128xf32> to vector<32xf32>
    %125 = vector.shape_cast %124 : vector<32xf32> to vector<32x1xf32>
    %126 = vector.broadcast %125 : vector<32x1xf32> to vector<32x128xf32>
    %127 = arith.subf %123, %126 : vector<32x128xf32>
    %128 = math.exp %127 : vector<32x128xf32>
    %cst_64 = arith.constant 0.000000e+00 : f32
    %129 = vector.broadcast %cst_64 : f32 to vector<32x128xf32>
    %130 = arith.select %121, %128, %129 : vector<32x128xi1>, vector<32x128xf32>
    %cst_65 = arith.constant dense<0.000000e+00> : vector<32xf32>
    %131 = vector.multi_reduction <add>, %130, %cst_65 [1] : vector<32x128xf32> to vector<32xf32>
    %132 = vector.shape_cast %131 : vector<32xf32> to vector<32x1xf32>
    %133 = vector.broadcast %132 : vector<32x1xf32> to vector<32x128xf32>
    %134 = arith.divf %130, %133 : vector<32x128xf32>
    %135 = vector.extract_strided_slice %134 {offsets = [0, 1], sizes = [32, 4], strides = [1, 1]} : vector<32x128xf32> to vector<32x4xf32>
    %c0_66 = arith.constant 0 : index
    %c0_67 = arith.constant 0 : index
    %136 = vector.load %arg18[%c0_66, %c0_67] : memref<32x1xf32, #tpu.memory_space<vmem>>, vector<32x1xf32>
    tpu.vector_store %arg18[%c0_66, %c0_67], %115 {strides = array<i32>} : memref<32x1xf32, #tpu.memory_space<vmem>>, vector<32x1xf32>,
    %c0_68 = arith.constant 0 : index
    %c0_69 = arith.constant 0 : index
    %137 = vector.load %arg19[%c0_68, %c0_69] : memref<32x4xf32, #tpu.memory_space<vmem>>, vector<32x4xf32>
    tpu.vector_store %arg19[%c0_68, %c0_69], %135 {strides = array<i32>} : memref<32x4xf32, #tpu.memory_space<vmem>>, vector<32x4xf32>,
    return
  }
}

</mosaic_0001>

<llo_original>
// kernel: tpu_custom_call.1
$region0: #{tpu_custom_call.1}
  #allocation0 [shape = 'u32[]', space=smem, size = 0x4, offset = 0x4, fixed_abs, tag = 'smem constant byte address 0x4 - core index']
  #allocation1 [shape = 'u32[144,128]{1,0:T(1,128)}', space=vmem, size = 0x12000, scoped, tag = 'internal scratch']
  %s0 = inlined_call_operand.hbm [shape: bf16[32,32], index: 0, kind: input, shape index: {}]
  %s1 = inlined_call_operand.hbm [shape: bf16[32,64], index: 1, kind: input, shape index: {}]
  %s2 = inlined_call_operand.vmem [shape: f32[1,64], index: 2, kind: input, shape index: {}]
  %s3 = inlined_call_operand.hbm [shape: f32[1,64], index: 3, kind: input, shape index: {}]
  %s4 = inlined_call_operand.vmem [shape: f32[1,64], index: 4, kind: input, shape index: {}]
  %s5 = inlined_call_operand.hbm [shape: bf16[64,128], index: 5, kind: input, shape index: {}]
  %s6 = inlined_call_operand.vmem [shape: f32[1,128], index: 6, kind: input, shape index: {}]
  %s7 = inlined_call_operand.vmem [shape: f32[1,128], index: 7, kind: input, shape index: {}]
  %s8 = inlined_call_operand.vmem [shape: f32[1,128], index: 8, kind: input, shape index: {}]
  %s9 = inlined_call_operand.hbm [shape: bf16[128,256], index: 9, kind: input, shape index: {}]
  %s10 = inlined_call_operand.vmem [shape: f32[1,256], index: 10, kind: input, shape index: {}]
  %s11 = inlined_call_operand.vmem [shape: f32[1,256], index: 11, kind: input, shape index: {}]
  %s12 = inlined_call_operand.vmem [shape: f32[1,256], index: 12, kind: input, shape index: {}]
  %s13 = inlined_call_operand.hbm [shape: bf16[256,512], index: 13, kind: input, shape index: {}]
  %s14 = inlined_call_operand.vmem [shape: f32[1,512], index: 14, kind: input, shape index: {}]
  %s15 = inlined_call_operand.hbm [shape: bf16[512,128], index: 15, kind: input, shape index: {}]
  %s16 = inlined_call_operand.vmem [shape: f32[1,128], index: 16, kind: input, shape index: {}]
  %s17 = inlined_call_operand.hbm [shape: bf16[32,512], index: 17, kind: output, shape index: {0}]
  %s18 = inlined_call_operand.vmem [shape: f32[32,1], index: 18, kind: output, shape index: {1}]
  %s19 = inlined_call_operand.vmem [shape: f32[32,4], index: 19, kind: output, shape index: {2}]
  %20 = xla_tuple %s17, %s18, %s19
  %s21 = sld [smem:[#allocation0]]
  $region122: #{tpu_custom_call.1} parent=0
    _
  %s23 = ssub.s32 1, %s21
  %s24 = scalar_select 0, %s23, %s21
  $region1: #{tpu_custom_call.1} parent=0
    #allocation2 [shape = 'u8[8192]{0}', space=vmem, size = 0x2000, scoped, tag = 'input window, operand 0, single buffered']
    #allocation3 [shape = 's32[1]{0}', space=sflag, size = 0x4, scoped, tag = 'scoped memory for tpu_custom_call.1']
    #allocation4 [shape = 's32[1]{0}', space=sflag, size = 0x4, scoped, tag = 'scoped memory for tpu_custom_call.1']
    #allocation5 [shape = 'u8[8192]{0}', space=vmem, size = 0x2000, scoped, tag = 'input window, operand 1, single buffered']
    #allocation6 [shape = 's32[1]{0}', space=sflag, size = 0x4, scoped, tag = 'scoped memory for tpu_custom_call.1']
    #allocation7 [shape = 'u8[512]{0}', space=vmem, size = 0x400, scoped, tag = 'input window, operand 3, single buffered']
    #allocation8 [shape = 'u8[16384]{0}', space=vmem, size = 0x4000, scoped, tag = 'input window, operand 5, single buffered']
    #allocation9 [shape = 's32[1]{0}', space=sflag, size = 0x4, scoped, tag = 'scoped memory for tpu_custom_call.1']
    #allocation10 [shape = 'u8[65536]{0}', space=vmem, size = 0x10000, scoped, tag = 'input window, operand 9, single buffered']
    #allocation11 [shape = 'u8[262144]{0}', space=vmem, size = 0x40000, scoped, tag = 'input window, operand 13, single buffered']
    #allocation12 [shape = 's32[1]{0}', space=sflag, size = 0x4, scoped, tag = 'scoped memory for tpu_custom_call.1']
    #allocation13 [shape = 'u8[131072]{0}', space=vmem, size = 0x20000, scoped, tag = 'input window, operand 15, single buffered']
    #allocation14 [shape = 'u8[32768]{0}', space=vmem, size = 0x8000, scoped, tag = 'output window, operand 0, single buffered']
    %25 = vsyncpa [#allocation3], 0
    %26 = vsyncpa [#allocation6], 0
    %27 = vsyncpa [#allocation9], 0
    %28 = vsyncpa [#allocation12], 0
    %29 = vsyncpa [#allocation4], 0
    // Predicated region
    $region2: #{tpu_custom_call.1} parent=1 // pred_check
      _
    $region3: #{tpu_custom_call.1} parent=1 // pred_check_branch
      %31 = sbr.rel (0) target = $region5
    $region4: #{tpu_custom_call.1} parent=1 // pred_region
      %s33 = ssub.s32 256, 256
      %34 = vsyncadd [#allocation3], %s33
      %s35 = sshll.u32 [#allocation2], 4
      %s36 = int_to_ptr.vmem [resolvable:$true] %s35
      %41 = dma.hbm_to_vmem [thread:$0]  %s0, 256, %s36, [#allocation3], 64, 64, 4
    $region5: #{tpu_custom_call.1} parent=1 // pred_fallthru
      _
    // Predicated region
    $region6: #{tpu_custom_call.1} parent=1 // pred_check
      _
    $region7: #{tpu_custom_call.1} parent=1 // pred_check_branch
      %43 = sbr.rel (0) target = $region9
    $region8: #{tpu_custom_call.1} parent=1 // pred_region
      %s45 = ssub.s32 256, 256
      %46 = vsyncadd [#allocation6], %s45
      %s47 = sshll.u32 [#allocation5], 4
      %s48 = int_to_ptr.vmem [resolvable:$true] %s47
      %53 = dma.hbm_to_vmem [thread:$0]  %s1, 256, %s48, [#allocation6], 64, 64, 4
    $region9: #{tpu_custom_call.1} parent=1 // pred_fallthru
      _
    // Predicated region
    $region10: #{tpu_custom_call.1} parent=1 // pred_check
      _
    $region11: #{tpu_custom_call.1} parent=1 // pred_check_branch
      %55 = sbr.rel (0) target = $region13
    $region12: #{tpu_custom_call.1} parent=1 // pred_region
      _
    $region13: #{tpu_custom_call.1} parent=1 // pred_fallthru
      _
    // Predicated region
    $region14: #{tpu_custom_call.1} parent=1 // pred_check
      _
    $region15: #{tpu_custom_call.1} parent=1 // pred_check_branch
      %57 = sbr.rel (0) target = $region17
    $region16: #{tpu_custom_call.1} parent=1 // pred_region
      %s59 = ssub.s32 16, 16
      %60 = vsyncadd [#allocation6], %s59
      %s62 = sshll.u32 [#allocation7], 4
      %s63 = int_to_ptr.vmem [resolvable:$true] %s62
      %65 = dma.hbm_to_vmem [thread:$0]  %s3, 16, %s63, [#allocation6]
    $region17: #{tpu_custom_call.1} parent=1 // pred_fallthru
      _
    // Predicated region
    $region18: #{tpu_custom_call.1} parent=1 // pred_check
      _
    $region19: #{tpu_custom_call.1} parent=1 // pred_check_branch
      %67 = sbr.rel (0) target = $region21
    $region20: #{tpu_custom_call.1} parent=1 // pred_region
      _
    $region21: #{tpu_custom_call.1} parent=1 // pred_fallthru
      _
    // Predicated region
    $region22: #{tpu_custom_call.1} parent=1 // pred_check
      _
    $region23: #{tpu_custom_call.1} parent=1 // pred_check_branch
      %69 = sbr.rel (0) target = $region25
    $region24: #{tpu_custom_call.1} parent=1 // pred_region
      %s71 = ssub.s32 512, 512
      %72 = vsyncadd [#allocation9], %s71
      %s73 = sshll.u32 [#allocation8], 4
      %s74 = int_to_ptr.vmem [resolvable:$true] %s73
      %79 = dma.hbm_to_vmem [thread:$0]  %s5, 512, %s74, [#allocation9], 64, 64, 4
    $region25: #{tpu_custom_call.1} parent=1 // pred_fallthru
      _
    // Predicated region
    $region26: #{tpu_custom_call.1} parent=1 // pred_check
      _
    $region27: #{tpu_custom_call.1} parent=1 // pred_check_branch
      %81 = sbr.rel (0) target = $region29
    $region28: #{tpu_custom_call.1} parent=1 // pred_region
      _
    $region29: #{tpu_custom_call.1} parent=1 // pred_fallthru
      _
    // Predicated region
    $region30: #{tpu_custom_call.1} parent=1 // pred_check
      _
    $region31: #{tpu_custom_call.1} parent=1 // pred_check_branch
      %83 = sbr.rel (0) target = $region33
    $region32: #{tpu_custom_call.1} parent=1 // pred_region
      _
    $region33: #{tpu_custom_call.1} parent=1 // pred_fallthru
      _
    // Predicated region
    $region34: #{tpu_custom_call.1} parent=1 // pred_check
      _
    $region35: #{tpu_custom_call.1} parent=1 // pred_check_branch
      %85 = sbr.rel (0) target = $region37
    $region36: #{tpu_custom_call.1} parent=1 // pred_region
      _
    $region37: #{tpu_custom_call.1} parent=1 // pred_fallthru
      _
    // Predicated region
    $region38: #{tpu_custom_call.1} parent=1 // pred_check
      _
    $region39: #{tpu_custom_call.1} parent=1 // pred_check_branch
      %87 = sbr.rel (0) target = $region41
    $region40: #{tpu_custom_call.1} parent=1 // pred_region
      %s89 = ssub.s32 2048, 2048
      %90 = vsyncadd [#allocation9], %s89
      %s91 = sshll.u32 [#allocation10], 4
      %s92 = int_to_ptr.vmem [resolvable:$true] %s91
      %97 = dma.hbm_to_vmem [thread:$0]  %s9, 2048, %s92, [#allocation9], 128, 128, 8
    $region41: #{tpu_custom_call.1} parent=1 // pred_fallthru
      _
    // Predicated region
    $region42: #{tpu_custom_call.1} parent=1 // pred_check
      _
    $region43: #{tpu_custom_call.1} parent=1 // pred_check_branch
      %99 = sbr.rel (0) target = $region45
    $region44: #{tpu_custom_call.1} parent=1 // pred_region
      _
    $region45: #{tpu_custom_call.1} parent=1 // pred_fallthru
      _
    // Predicated region
    $region46: #{tpu_custom_call.1} parent=1 // pred_check
      _
    $region47: #{tpu_custom_call.1} parent=1 // pred_check_branch
      %101 = sbr.rel (0) target = $region49
    $region48: #{tpu_custom_call.1} parent=1 // pred_region
      _
    $region49: #{tpu_custom_call.1} parent=1 // pred_fallthru
      _
    // Predicated region
    $region50: #{tpu_custom_call.1} parent=1 // pred_check
      _
    $region51: #{tpu_custom_call.1} parent=1 // pred_check_branch
      %103 = sbr.rel (0) target = $region53
    $region52: #{tpu_custom_call.1} parent=1 // pred_region
      _
    $region53: #{tpu_custom_call.1} parent=1 // pred_fallthru
      _
    // Predicated region
    $region54: #{tpu_custom_call.1} parent=1 // pred_check
      _
    $region55: #{tpu_custom_call.1} parent=1 // pred_check_branch
      %105 = sbr.rel (0) target = $region57
    $region56: #{tpu_custom_call.1} parent=1 // pred_region
      %s107 = ssub.s32 8192, 8192
      %108 = vsyncadd [#allocation12], %s107
      %s109 = sshll.u32 [#allocation11], 4
      %s110 = int_to_ptr.vmem [resolvable:$true] %s109
      %115 = dma.hbm_to_vmem [thread:$0]  %s13, 8192, %s110, [#allocation12], 256, 256, 16
    $region57: #{tpu_custom_call.1} parent=1 // pred_fallthru
      _
    // Predicated region
    $region58: #{tpu_custom_call.1} parent=1 // pred_check
      _
    $region59: #{tpu_custom_call.1} parent=1 // pred_check_branch
      %117 = sbr.rel (0) target = $region61
    $region60: #{tpu_custom_call.1} parent=1 // pred_region
      _
    $region61: #{tpu_custom_call.1} parent=1 // pred_fallthru
      _
    // Predicated region
    $region62: #{tpu_custom_call.1} parent=1 // pred_check
      _
    $region63: #{tpu_custom_call.1} parent=1 // pred_check_branch
      %119 = sbr.rel (0) target = $region65
    $region64: #{tpu_custom_call.1} parent=1 // pred_region
      %s121 = ssub.s32 4096, 4096
      %122 = vsyncadd [#allocation12], %s121
      %s123 = sshll.u32 [#allocation13], 4
      %s124 = int_to_ptr.vmem [resolvable:$true] %s123
      %129 = dma.hbm_to_vmem [thread:$0]  %s15, 4096, %s124, [#allocation12], 64, 64, 4
    $region65: #{tpu_custom_call.1} parent=1 // pred_fallthru
      _
    // Predicated region
    $region66: #{tpu_custom_call.1} parent=1 // pred_check
      _
    $region67: #{tpu_custom_call.1} parent=1 // pred_check_branch
      %131 = sbr.rel (0) target = $region69
    $region68: #{tpu_custom_call.1} parent=1 // pred_region
      _
    $region69: #{tpu_custom_call.1} parent=1 // pred_fallthru
      _
    // Predicated region
    $region70: #{tpu_custom_call.1} parent=1 // pred_check
      _
    $region71: #{tpu_custom_call.1} parent=1 // pred_check_branch
      %133 = sbr.rel (0) target = $region73
    $region72: #{tpu_custom_call.1} parent=1 // pred_region
      %134 = dma.done [#allocation3], 256
    $region73: #{tpu_custom_call.1} parent=1 // pred_fallthru
      _
    // Predicated region
    $region74: #{tpu_custom_call.1} parent=1 // pred_check
      _
    $region75: #{tpu_custom_call.1} parent=1 // pred_check_branch
      %136 = sbr.rel (0) target = $region77
    $region76: #{tpu_custom_call.1} parent=1 // pred_region
      %137 = dma.done [#allocation6], 256
    $region77: #{tpu_custom_call.1} parent=1 // pred_fallthru
      _
    // Predicated region
    $region78: #{tpu_custom_call.1} parent=1 // pred_check
      _
    $region79: #{tpu_custom_call.1} parent=1 // pred_check_branch
      %139 = sbr.rel (0) target = $region81
    $region80: #{tpu_custom_call.1} parent=1 // pred_region
      %140 = dma.done [#allocation6], 16
    $region81: #{tpu_custom_call.1} parent=1 // pred_fallthru
      _
    // Predicated region
    $region82: #{tpu_custom_call.1} parent=1 // pred_check
      _
    $region83: #{tpu_custom_call.1} parent=1 // pred_check_branch
      %142 = sbr.rel (0) target = $region85
    $region84: #{tpu_custom_call.1} parent=1 // pred_region
      %143 = dma.done [#allocation9], 512
    $region85: #{tpu_custom_call.1} parent=1 // pred_fallthru
      _
    // Predicated region
    $region86: #{tpu_custom_call.1} parent=1 // pred_check
      _
    $region87: #{tpu_custom_call.1} parent=1 // pred_check_branch
      %145 = sbr.rel (0) target = $region89
    $region88: #{tpu_custom_call.1} parent=1 // pred_region
      %146 = dma.done [#allocation9], 2048
    $region89: #{tpu_custom_call.1} parent=1 // pred_fallthru
      _
    // Predicated region
    $region90: #{tpu_custom_call.1} parent=1 // pred_check
      _
    $region91: #{tpu_custom_call.1} parent=1 // pred_check_branch
      %148 = sbr.rel (0) target = $region93
    $region92: #{tpu_custom_call.1} parent=1 // pred_region
      %149 = dma.done [#allocation12], 8192
    $region93: #{tpu_custom_call.1} parent=1 // pred_fallthru
      _
    // Predicated region
    $region94: #{tpu_custom_call.1} parent=1 // pred_check
      _
    $region95: #{tpu_custom_call.1} parent=1 // pred_check_branch
      %151 = sbr.rel (0) target = $region97
    $region96: #{tpu_custom_call.1} parent=1 // pred_region
      %152 = dma.done [#allocation12], 4096
    $region97: #{tpu_custom_call.1} parent=1 // pred_fallthru
      _
    %v154 = vld [vmem:[#allocation2] sm:$0xf]
    %v155 = vld [vmem:[#allocation2 + $0x4] sm:$0xf]
    %v156 = vld [vmem:[#allocation2 + $0x8] sm:$0xf]
    %v157 = vld [vmem:[#allocation2 + $0xc] sm:$0xf]
    %v158 = vld [vmem:[#allocation5] sm:$0xf]
    %v159 = vld [vmem:[#allocation5 + $0x4] sm:$0xf]
    %v160 = vld [vmem:[#allocation5 + $0x8] sm:$0xf]
    %v161 = vld [vmem:[#allocation5 + $0xc] sm:$0xf]
    %v162 = vld [vmem:[%s2] sm:$0x1]
    %v164 = vlaneseq
    %v165 = vshrl.u32 %v164, 7
    %v166 = vsub.s32 0, %v165
    %v167 = vrot.slane %v162, %v166
    %v173 = vunpack.c.l.b16 %v154
    %v174 = vunpack.c.l.b16 %v155
    %v175 = vunpack.c.l.b16 %v156
    %v176 = vunpack.c.l.b16 %v157
    %v177 = vpack.c.b16 %v174, %v173
    %v178 = vpack.c.b16 %v176, %v175
    %v183 = vunpack.c.l.b16 %v158
    %v184 = vunpack.c.l.b16 %v159
    %v185 = vunpack.c.l.b16 %v160
    %v186 = vunpack.c.l.b16 %v161
    %v187 = vpack.c.b16 %v184, %v183
    %v188 = vpack.c.b16 %v186, %v185
    %vm191 = vcmask 261120
    %v193 = vsel %vm191, %v177, 0
    %v196 = vsel %vm191, %v178, 0
    %198 = vmatprep.subr.bf16.mxu0 0
    %199 = vmatpush1.bf16.msra.mxu0 %v187
    %200 = vmatprep.subr.bf16.mxu0 0
    %201 = vmatpush1.bf16.msra.mxu0 %v188
    %202 = vmatprep.subr.bf16.mxu0 0
    %203 = vmatpush1.bf16.msra.mxu0 0
    %204 = vmatprep.subr.bf16.mxu0 0
    %205 = vmatpush1.bf16.msra.mxu0 0
    %206 = vmatprep.subr.bf16.mxu0 0
    %207 = vmatpush1.bf16.msra.mxu0 0
    %208 = vmatprep.subr.bf16.mxu0 0
    %209 = vmatpush1.bf16.msra.mxu0 0
    %210 = vmatprep.subr.bf16.mxu0 0
    %211 = vmatpush1.bf16.msra.mxu0 0
    %212 = vmatprep.subr.bf16.mxu0 0
    %213 = vmatpush1.bf16.msra.mxu0 0
    %214 = vmatprep.subr.bf16.mxu0 0
    %215 = vmatpush1.bf16.msra.mxu0 0
    %216 = vmatprep.subr.bf16.mxu0 0
    %217 = vmatpush1.bf16.msra.mxu0 0
    %218 = vmatprep.subr.bf16.mxu0 0
    %219 = vmatpush1.bf16.msra.mxu0 0
    %220 = vmatprep.subr.bf16.mxu0 0
    %221 = vmatpush1.bf16.msra.mxu0 0
    %222 = vmatprep.subr.bf16.mxu0 0
    %223 = vmatpush1.bf16.msra.mxu0 0
    %224 = vmatprep.subr.bf16.mxu0 0
    %225 = vmatpush1.bf16.msra.mxu0 0
    %226 = vmatprep.subr.bf16.mxu0 0
    %227 = vmatpush1.bf16.msra.mxu0 0
    %228 = vmatprep.subr.bf16.mxu0 0
    %229 = vmatpush1.bf16.msra.mxu0 0
    %230 = vmatprep.mubr.bf16.mxu0 0
    %231 = vmatmul.mubr.bf16.gmra.mrb[0].mxu0 %v193
    %v232 = vpop.f32.mrb[0].mxu0
    %v233 = vadd.f32 %v167, %v232
    %v234 = vpop.f32.mrb[0].mxu0
    %v235 = vpop.f32.mrb[0].mxu0
    %v236 = vadd.f32 %v167, %v235
    %v237 = vpop.f32.mrb[0].mxu0
    %238 = vmatprep.mubr.bf16.mxu0 0
    %239 = vmatmul.mubr.bf16.gmra.mrb[0].mxu0 %v196
    %v240 = vpop.f32.mrb[0].mxu0
    %v241 = vadd.f32 %v167, %v240
    %v242 = vpop.f32.mrb[0].mxu0
    %v243 = vpop.f32.mrb[0].mxu0
    %v244 = vadd.f32 %v167, %v243
    %v245 = vpop.f32.mrb[0].mxu0
    %246 = vdwg.mxu0
    %v247 = vmax.f32 %v233, 0.0
    %v248 = vmax.f32 %v236, 0.0
    %v249 = vmax.f32 %v241, 0.0
    %v250 = vmax.f32 %v244, 0.0
    %vm251 = vcmask 523264
    %v252 = vsel %vm251, %v247, 0.0
    %v253 = vsel %vm251, %v248, 0.0
    %v254 = vadd.f32 %v252, %v253
    %v255 = vsel %vm251, %v249, 0.0
    %v256 = vadd.f32 %v254, %v255
    %v257 = vsel %vm251, %v250, 0.0
    %v258 = vadd.f32 %v256, %v257
    %v259 = vrot.slane %v258, 4
    %v260 = vadd.f32 %v258, %v259
    %v261 = vrot.slane %v260, 2
    %v262 = vadd.f32 %v260, %v261
    %v263 = vrot.slane %v262, 1
    %v264 = vadd.f32 %v262, %v263
    %v265 = vrcp.pop 32.0
    %v266 = vmul.f32 %v264, %v265
    %v267 = vsub.f32 %v247, %v266
    %v268 = vsub.f32 %v248, %v266
    %v269 = vsub.f32 %v249, %v266
    %v270 = vsub.f32 %v250, %v266
    %v271 = vmul.f32 %v267, %v267
    %v272 = vmul.f32 %v268, %v268
    %v273 = vmul.f32 %v269, %v269
    %v274 = vmul.f32 %v270, %v270
    %v275 = vsel %vm251, %v271, 0.0
    %v276 = vsel %vm251, %v272, 0.0
    %v277 = vadd.f32 %v275, %v276
    %v278 = vsel %vm251, %v273, 0.0
    %v279 = vadd.f32 %v277, %v278
    %v280 = vsel %vm251, %v274, 0.0
    %v281 = vadd.f32 %v279, %v280
    %v282 = vrot.slane %v281, 4
    %v283 = vadd.f32 %v281, %v282
    %v284 = vrot.slane %v283, 2
    %v285 = vadd.f32 %v283, %v284
    %v286 = vrot.slane %v285, 1
    %v287 = vadd.f32 %v285, %v286
    %v288 = vmul.f32 %v287, %v265
    %v289 = vld [vmem:[#allocation7] sm:$0x1]
    %v290 = vadd.f32 %v288, 1e-05
    %v291 = vrsqrt.pop %v290
    %v292 = vmul.f32 %v289, %v291
    %v294 = vlaneseq
    %v295 = vshrl.u32 %v294, 7
    %v296 = vsub.s32 0, %v295
    %v297 = vrot.slane %v292, %v296
    %v299 = vmul.f32 %v267, %v297
    %v300 = vmul.f32 %v268, %v297
    %v301 = vmul.f32 %v269, %v297
    %v302 = vmul.f32 %v270, %v297
    %v303 = vld [vmem:[%s4] sm:$0x1]
    %v305 = vlaneseq
    %v306 = vshrl.u32 %v305, 7
    %v307 = vsub.s32 0, %v306
    %v308 = vrot.slane %v303, %v307
    %v310 = vadd.f32 %v299, %v308
    %v311 = vadd.f32 %v300, %v308
    %v312 = vadd.f32 %v301, %v308
    %v313 = vadd.f32 %v302, %v308
    %v314 = vpack.c.bf16 %v311, %v310
    %v315 = vpack.c.bf16 %v313, %v312
    %v316 = vld [vmem:[#allocation8] sm:$0xf]
    %v317 = vld [vmem:[#allocation8 + $0x4] sm:$0xf]
    %v318 = vld [vmem:[#allocation8 + $0x8] sm:$0xf]
    %v319 = vld [vmem:[#allocation8 + $0xc] sm:$0xf]
    %v320 = vld [vmem:[#allocation8 + $0x10] sm:$0xf]
    %v321 = vld [vmem:[#allocation8 + $0x14] sm:$0xf]
    %v322 = vld [vmem:[#allocation8 + $0x18] sm:$0xf]
    %v323 = vld [vmem:[#allocation8 + $0x1c] sm:$0xf]
    %v324 = vld [vmem:[%s6] sm:$0x1]
    %v326 = vlaneseq
    %v327 = vshrl.u32 %v326, 7
    %v328 = vsub.s32 0, %v327
    %v329 = vrot.slane %v324, %v328
    %v339 = vunpack.c.l.b16 %v316
    %v340 = vunpack.c.l.b16 %v317
    %v341 = vunpack.c.l.b16 %v318
    %v342 = vunpack.c.l.b16 %v319
    %v343 = vunpack.c.l.b16 %v320
    %v344 = vunpack.c.l.b16 %v321
    %v345 = vunpack.c.l.b16 %v322
    %v346 = vunpack.c.l.b16 %v323
    %v347 = vpack.c.b16 %v340, %v339
    %v348 = vpack.c.b16 %v342, %v341
    %v349 = vpack.c.b16 %v344, %v343
    %v350 = vpack.c.b16 %v346, %v345
    %v356 = vsel %vm251, %v314, 0
    %v359 = vsel %vm251, %v315, 0
    %361 = vmatprep.subr.bf16.mxu0 0
    %362 = vmatpush1.bf16.msra.mxu0 %v347
    %363 = vmatprep.subr.bf16.mxu0 0
    %364 = vmatpush1.bf16.msra.mxu0 %v348
    %365 = vmatprep.subr.bf16.mxu0 0
    %366 = vmatpush1.bf16.msra.mxu0 %v349
    %367 = vmatprep.subr.bf16.mxu0 0
    %368 = vmatpush1.bf16.msra.mxu0 %v350
    %369 = vmatprep.subr.bf16.mxu0 0
    %370 = vmatpush1.bf16.msra.mxu0 0
    %371 = vmatprep.subr.bf16.mxu0 0
    %372 = vmatpush1.bf16.msra.mxu0 0
    %373 = vmatprep.subr.bf16.mxu0 0
    %374 = vmatpush1.bf16.msra.mxu0 0
    %375 = vmatprep.subr.bf16.mxu0 0
    %376 = vmatpush1.bf16.msra.mxu0 0
    %377 = vmatprep.subr.bf16.mxu0 0
    %378 = vmatpush1.bf16.msra.mxu0 0
    %379 = vmatprep.subr.bf16.mxu0 0
    %380 = vmatpush1.bf16.msra.mxu0 0
    %381 = vmatprep.subr.bf16.mxu0 0
    %382 = vmatpush1.bf16.msra.mxu0 0
    %383 = vmatprep.subr.bf16.mxu0 0
    %384 = vmatpush1.bf16.msra.mxu0 0
    %385 = vmatprep.subr.bf16.mxu0 0
    %386 = vmatpush1.bf16.msra.mxu0 0
    %387 = vmatprep.subr.bf16.mxu0 0
    %388 = vmatpush1.bf16.msra.mxu0 0
    %389 = vmatprep.subr.bf16.mxu0 0
    %390 = vmatpush1.bf16.msra.mxu0 0
    %391 = vmatprep.subr.bf16.mxu0 0
    %392 = vmatpush1.bf16.msra.mxu0 0
    %393 = vmatprep.mubr.bf16.mxu0 0
    %394 = vmatmul.mubr.bf16.gmra.mrb[0].mxu0 %v356
    %v395 = vpop.f32.mrb[0].mxu0
    %v396 = vadd.f32 %v329, %v395
    %v397 = vpop.f32.mrb[0].mxu0
    %v398 = vpop.f32.mrb[0].mxu0
    %v399 = vadd.f32 %v329, %v398
    %v400 = vpop.f32.mrb[0].mxu0
    %401 = vmatprep.mubr.bf16.mxu0 0
    %402 = vmatmul.mubr.bf16.gmra.mrb[0].mxu0 %v359
    %v403 = vpop.f32.mrb[0].mxu0
    %v404 = vadd.f32 %v329, %v403
    %v405 = vpop.f32.mrb[0].mxu0
    %v406 = vpop.f32.mrb[0].mxu0
    %v407 = vadd.f32 %v329, %v406
    %v408 = vpop.f32.mrb[0].mxu0
    %409 = vdwg.mxu0
    %v410 = vmax.f32 %v396, 0.0
    %v411 = vmax.f32 %v399, 0.0
    %v412 = vmax.f32 %v404, 0.0
    %v413 = vmax.f32 %v407, 0.0
    %v414 = vadd.f32 %v410, %v411
    %v415 = vadd.f32 %v414, %v412
    %v416 = vadd.f32 %v415, %v413
    %v417 = vrot.slane %v416, 4
    %v418 = vadd.f32 %v416, %v417
    %v419 = vrot.slane %v418, 2
    %v420 = vadd.f32 %v418, %v419
    %v421 = vrot.slane %v420, 1
    %v422 = vadd.f32 %v420, %v421
    %v423 = vmul.f32 %v422, %v265
    %v424 = vsub.f32 %v410, %v423
    %v425 = vsub.f32 %v411, %v423
    %v426 = vsub.f32 %v412, %v423
    %v427 = vsub.f32 %v413, %v423
    %v428 = vmul.f32 %v424, %v424
    %v429 = vmul.f32 %v425, %v425
    %v430 = vmul.f32 %v426, %v426
    %v431 = vmul.f32 %v427, %v427
    %v432 = vadd.f32 %v428, %v429
    %v433 = vadd.f32 %v432, %v430
    %v434 = vadd.f32 %v433, %v431
    %v435 = vrot.slane %v434, 4
    %v436 = vadd.f32 %v434, %v435
    %v437 = vrot.slane %v436, 2
    %v438 = vadd.f32 %v436, %v437
    %v439 = vrot.slane %v438, 1
    %v440 = vadd.f32 %v438, %v439
    %v441 = vmul.f32 %v440, %v265
    %v442 = vld [vmem:[%s7] sm:$0x1]
    %v443 = vadd.f32 %v441, 1e-05
    %v444 = vrsqrt.pop %v443
    %v445 = vmul.f32 %v442, %v444
    %v447 = vlaneseq
    %v448 = vshrl.u32 %v447, 7
    %v449 = vsub.s32 0, %v448
    %v450 = vrot.slane %v445, %v449
    %v452 = vmul.f32 %v424, %v450
    %v453 = vmul.f32 %v425, %v450
    %v454 = vmul.f32 %v426, %v450
    %v455 = vmul.f32 %v427, %v450
    %v456 = vld [vmem:[%s8] sm:$0x1]
    %v458 = vlaneseq
    %v459 = vshrl.u32 %v458, 7
    %v460 = vsub.s32 0, %v459
    %v461 = vrot.slane %v456, %v460
    %v463 = vadd.f32 %v452, %v461
    %v464 = vadd.f32 %v453, %v461
    %v465 = vadd.f32 %v454, %v461
    %v466 = vadd.f32 %v455, %v461
    %v467 = vpack.c.bf16 %v464, %v463
    %v468 = vpack.c.bf16 %v466, %v465
    %v469 = vld [vmem:[#allocation10] sm:$0xff]
    %v470 = vld [vmem:[#allocation10 + $0x8] sm:$0xff]
    %v471 = vld [vmem:[#allocation10 + $0x10] sm:$0xff]
    %v472 = vld [vmem:[#allocation10 + $0x18] sm:$0xff]
    %v473 = vld [vmem:[#allocation10 + $0x20] sm:$0xff]
    %v474 = vld [vmem:[#allocation10 + $0x28] sm:$0xff]
    %v475 = vld [vmem:[#allocation10 + $0x30] sm:$0xff]
    %v476 = vld [vmem:[#allocation10 + $0x38] sm:$0xff]
    %v477 = vld [vmem:[#allocation10 + $0x40] sm:$0xff]
    %v478 = vld [vmem:[#allocation10 + $0x48] sm:$0xff]
    %v479 = vld [vmem:[#allocation10 + $0x50] sm:$0xff]
    %v480 = vld [vmem:[#allocation10 + $0x58] sm:$0xff]
    %v481 = vld [vmem:[#allocation10 + $0x60] sm:$0xff]
    %v482 = vld [vmem:[#allocation10 + $0x68] sm:$0xff]
    %v483 = vld [vmem:[#allocation10 + $0x70] sm:$0xff]
    %v484 = vld [vmem:[#allocation10 + $0x78] sm:$0xff]
    %v485 = vld [vmem:[%s10] sm:$0x3]
    %v487 = vlaneseq
    %v488 = vshrl.u32 %v487, 7
    %v489 = vsub.s32 0, %v488
    %v490 = vrot.slane %v485, %v489
    %v491 = vlaneseq
    %v492 = vshrl.u32 %v491, 7
    %v493 = vsub.s32 1, %v492
    %v494 = vrot.slane %v485, %v493
    %v513 = vunpack.c.l.b16 %v469
    %v514 = vunpack.c.h.b16 %v469
    %v515 = vunpack.c.l.b16 %v470
    %v516 = vunpack.c.h.b16 %v470
    %v517 = vunpack.c.l.b16 %v471
    %v518 = vunpack.c.h.b16 %v471
    %v519 = vunpack.c.l.b16 %v472
    %v520 = vunpack.c.h.b16 %v472
    %v521 = vunpack.c.l.b16 %v473
    %v522 = vunpack.c.h.b16 %v473
    %v523 = vunpack.c.l.b16 %v474
    %v524 = vunpack.c.h.b16 %v474
    %v525 = vunpack.c.l.b16 %v475
    %v526 = vunpack.c.h.b16 %v475
    %v527 = vunpack.c.l.b16 %v476
    %v528 = vunpack.c.h.b16 %v476
    %v529 = vunpack.c.l.b16 %v477
    %v530 = vunpack.c.h.b16 %v477
    %v531 = vunpack.c.l.b16 %v478
    %v532 = vunpack.c.h.b16 %v478
    %v533 = vunpack.c.l.b16 %v479
    %v534 = vunpack.c.h.b16 %v479
    %v535 = vunpack.c.l.b16 %v480
    %v536 = vunpack.c.h.b16 %v480
    %v537 = vunpack.c.l.b16 %v481
    %v538 = vunpack.c.h.b16 %v481
    %v539 = vunpack.c.l.b16 %v482
    %v540 = vunpack.c.h.b16 %v482
    %v541 = vunpack.c.l.b16 %v483
    %v542 = vunpack.c.h.b16 %v483
    %v543 = vunpack.c.l.b16 %v484
    %v544 = vunpack.c.h.b16 %v484
    %v545 = vpack.c.b16 %v515, %v513
    %v546 = vpack.c.b16 %v516, %v514
    %v547 = vpack.c.b16 %v519, %v517
    %v548 = vpack.c.b16 %v520, %v518
    %v549 = vpack.c.b16 %v523, %v521
    %v550 = vpack.c.b16 %v524, %v522
    %v551 = vpack.c.b16 %v527, %v525
    %v552 = vpack.c.b16 %v528, %v526
    %v553 = vpack.c.b16 %v531, %v529
    %v554 = vpack.c.b16 %v532, %v530
    %v555 = vpack.c.b16 %v535, %v533
    %v556 = vpack.c.b16 %v536, %v534
    %v557 = vpack.c.b16 %v539, %v537
    %v558 = vpack.c.b16 %v540, %v538
    %v559 = vpack.c.b16 %v543, %v541
    %v560 = vpack.c.b16 %v544, %v542
    %577 = vmatprep.subr.bf16.mxu0 %v546
    %578 = vmatpush1.bf16.msra.mxu0 %v545
    %579 = vmatprep.subr.bf16.mxu0 %v548
    %580 = vmatpush1.bf16.msra.mxu0 %v547
    %581 = vmatprep.subr.bf16.mxu0 %v550
    %582 = vmatpush1.bf16.msra.mxu0 %v549
    %583 = vmatprep.subr.bf16.mxu0 %v552
    %584 = vmatpush1.bf16.msra.mxu0 %v551
    %585 = vmatprep.subr.bf16.mxu0 %v554
    %586 = vmatpush1.bf16.msra.mxu0 %v553
    %587 = vmatprep.subr.bf16.mxu0 %v556
    %588 = vmatpush1.bf16.msra.mxu0 %v555
    %589 = vmatprep.subr.bf16.mxu0 %v558
    %590 = vmatpush1.bf16.msra.mxu0 %v557
    %591 = vmatprep.subr.bf16.mxu0 %v560
    %592 = vmatpush1.bf16.msra.mxu0 %v559
    %593 = vmatprep.subr.bf16.mxu0 0
    %594 = vmatpush1.bf16.msra.mxu0 0
    %595 = vmatprep.subr.bf16.mxu0 0
    %596 = vmatpush1.bf16.msra.mxu0 0
    %597 = vmatprep.subr.bf16.mxu0 0
    %598 = vmatpush1.bf16.msra.mxu0 0
    %599 = vmatprep.subr.bf16.mxu0 0
    %600 = vmatpush1.bf16.msra.mxu0 0
    %601 = vmatprep.subr.bf16.mxu0 0
    %602 = vmatpush1.bf16.msra.mxu0 0
    %603 = vmatprep.subr.bf16.mxu0 0
    %604 = vmatpush1.bf16.msra.mxu0 0
    %605 = vmatprep.subr.bf16.mxu0 0
    %606 = vmatpush1.bf16.msra.mxu0 0
    %607 = vmatprep.subr.bf16.mxu0 0
    %608 = vmatpush1.bf16.msra.mxu0 0
    %609 = vmatprep.mubr.bf16.mxu0 0
    %610 = vmatmul.mubr.bf16.gmra.mrb[0].mxu0 %v467
    %v611 = vpop.f32.mrb[0].mxu0
    %v612 = vadd.f32 %v490, %v611
    %v613 = vpop.f32.mrb[0].mxu0
    %v614 = vadd.f32 %v494, %v613
    %v615 = vpop.f32.mrb[0].mxu0
    %v616 = vadd.f32 %v490, %v615
    %v617 = vpop.f32.mrb[0].mxu0
    %v618 = vadd.f32 %v494, %v617
    %619 = vmatprep.mubr.bf16.mxu0 0
    %620 = vmatmul.mubr.bf16.gmra.mrb[0].mxu0 %v468
    %v621 = vpop.f32.mrb[0].mxu0
    %v622 = vadd.f32 %v490, %v621
    %v623 = vpop.f32.mrb[0].mxu0
    %v624 = vadd.f32 %v494, %v623
    %v625 = vpop.f32.mrb[0].mxu0
    %v626 = vadd.f32 %v490, %v625
    %v627 = vpop.f32.mrb[0].mxu0
    %v628 = vadd.f32 %v494, %v627
    %629 = vdwg.mxu0
    %v630 = vmax.f32 %v612, 0.0
    %v631 = vmax.f32 %v614, 0.0
    %v632 = vmax.f32 %v616, 0.0
    %v633 = vmax.f32 %v618, 0.0
    %v634 = vmax.f32 %v622, 0.0
    %v635 = vmax.f32 %v624, 0.0
    %v636 = vmax.f32 %v626, 0.0
    %v637 = vmax.f32 %v628, 0.0
    %v638 = vadd.f32 %v630, %v632
    %v639 = vadd.f32 %v638, %v634
    %v640 = vadd.f32 %v639, %v636
    %v641 = vrot.slane %v640, 4
    %v642 = vadd.f32 %v640, %v641
    %v643 = vrot.slane %v642, 2
    %v644 = vadd.f32 %v642, %v643
    %v645 = vrot.slane %v644, 1
    %v646 = vadd.f32 %v644, %v645
    %v647 = vadd.f32 %v631, %v633
    %v648 = vadd.f32 %v647, %v635
    %v649 = vadd.f32 %v648, %v637
    %v650 = vrot.slane %v649, 4
    %v651 = vadd.f32 %v649, %v650
    %v652 = vrot.slane %v651, 2
    %v653 = vadd.f32 %v651, %v652
    %v654 = vrot.slane %v653, 1
    %v655 = vadd.f32 %v653, %v654
    %v656 = vmul.f32 %v646, %v265
    %v657 = vmul.f32 %v655, %v265
    %v658 = vsub.f32 %v630, %v656
    %v659 = vsub.f32 %v631, %v657
    %v660 = vsub.f32 %v632, %v656
    %v661 = vsub.f32 %v633, %v657
    %v662 = vsub.f32 %v634, %v656
    %v663 = vsub.f32 %v635, %v657
    %v664 = vsub.f32 %v636, %v656
    %v665 = vsub.f32 %v637, %v657
    %v666 = vmul.f32 %v658, %v658
    %v667 = vmul.f32 %v659, %v659
    %v668 = vmul.f32 %v660, %v660
    %v669 = vmul.f32 %v661, %v661
    %v670 = vmul.f32 %v662, %v662
    %v671 = vmul.f32 %v663, %v663
    %v672 = vmul.f32 %v664, %v664
    %v673 = vmul.f32 %v665, %v665
    %v674 = vadd.f32 %v666, %v668
    %v675 = vadd.f32 %v674, %v670
    %v676 = vadd.f32 %v675, %v672
    %v677 = vrot.slane %v676, 4
    %v678 = vadd.f32 %v676, %v677
    %v679 = vrot.slane %v678, 2
    %v680 = vadd.f32 %v678, %v679
    %v681 = vrot.slane %v680, 1
    %v682 = vadd.f32 %v680, %v681
    %v683 = vadd.f32 %v667, %v669
    %v684 = vadd.f32 %v683, %v671
    %v685 = vadd.f32 %v684, %v673
    %v686 = vrot.slane %v685, 4
    %v687 = vadd.f32 %v685, %v686
    %v688 = vrot.slane %v687, 2
    %v689 = vadd.f32 %v687, %v688
    %v690 = vrot.slane %v689, 1
    %v691 = vadd.f32 %v689, %v690
    %v692 = vmul.f32 %v682, %v265
    %v693 = vmul.f32 %v691, %v265
    %v694 = vld [vmem:[%s11] sm:$0x3]
    %v695 = vadd.f32 %v692, 1e-05
    %v696 = vadd.f32 %v693, 1e-05
    %v697 = vrsqrt.pop %v695
    %v698 = vrsqrt.pop %v696
    %v701 = vcombine.low %v697, %v698
    %v703 = vunpack.c.l.s4 1966171168
    %v704 = vunpack.c.0.s8 %v703
    %v705 = vlaneseq
    %v706 = vshrl.u32 %v705, 7
    %v707 = vsub.s32 %v704, %v706
    %v708 = vrot.slane %v701, %v707
    %v710 = vunpack.c.l.s4 1966171168
    %v711 = vunpack.c.0.s8 %v710
    %v712 = vlaneseq
    %v713 = vshrl.u32 %v712, 7
    %v714 = vsub.s32 %v711, %v713
    %v715 = vrot.slane %v708, %v714
    %v717 = vmul.f32 %v694, %v715
    %v719 = vlaneseq
    %v720 = vshrl.u32 %v719, 7
    %v721 = vsub.s32 0, %v720
    %v722 = vrot.slane %v717, %v721
    %v723 = vlaneseq
    %v724 = vshrl.u32 %v723, 7
    %v725 = vsub.s32 1, %v724
    %v726 = vrot.slane %v717, %v725
    %v729 = vmul.f32 %v658, %v722
    %v730 = vmul.f32 %v659, %v726
    %v731 = vmul.f32 %v660, %v722
    %v732 = vmul.f32 %v661, %v726
    %v733 = vmul.f32 %v662, %v722
    %v734 = vmul.f32 %v663, %v726
    %v735 = vmul.f32 %v664, %v722
    %v736 = vmul.f32 %v665, %v726
    %v737 = vld [vmem:[%s12] sm:$0x3]
    %v739 = vlaneseq
    %v740 = vshrl.u32 %v739, 7
    %v741 = vsub.s32 0, %v740
    %v742 = vrot.slane %v737, %v741
    %v743 = vlaneseq
    %v744 = vshrl.u32 %v743, 7
    %v745 = vsub.s32 1, %v744
    %v746 = vrot.slane %v737, %v745
    %v749 = vadd.f32 %v729, %v742
    %v750 = vadd.f32 %v730, %v746
    %v751 = vadd.f32 %v731, %v742
    %v752 = vadd.f32 %v732, %v746
    %v753 = vadd.f32 %v733, %v742
    %v754 = vadd.f32 %v734, %v746
    %v755 = vadd.f32 %v735, %v742
    %v756 = vadd.f32 %v736, %v746
    %v757 = vpack.c.bf16 %v751, %v749
    %v758 = vpack.c.bf16 %v752, %v750
    %v759 = vpack.c.bf16 %v755, %v753
    %v760 = vpack.c.bf16 %v756, %v754
    %v761 = vld [vmem:[#allocation11] sm:$0xff]
    %v762 = vld [vmem:[#allocation11 + $0x8] sm:$0xff]
    %v763 = vld [vmem:[#allocation11 + $0x10] sm:$0xff]
    %v764 = vld [vmem:[#allocation11 + $0x18] sm:$0xff]
    %v765 = vld [vmem:[#allocation11 + $0x20] sm:$0xff]
    %v766 = vld [vmem:[#allocation11 + $0x28] sm:$0xff]
    %v767 = vld [vmem:[#allocation11 + $0x30] sm:$0xff]
    %v768 = vld [vmem:[#allocation11 + $0x38] sm:$0xff]
    %v769 = vld [vmem:[#allocation11 + $0x40] sm:$0xff]
    %v770 = vld [vmem:[#allocation11 + $0x48] sm:$0xff]
    %v771 = vld [vmem:[#allocation11 + $0x50] sm:$0xff]
    %v772 = vld [vmem:[#allocation11 + $0x58] sm:$0xff]
    %v773 = vld [vmem:[#allocation11 + $0x60] sm:$0xff]
    %v774 = vld [vmem:[#allocation11 + $0x68] sm:$0xff]
    %v775 = vld [vmem:[#allocation11 + $0x70] sm:$0xff]
    %v776 = vld [vmem:[#allocation11 + $0x78] sm:$0xff]
    %v777 = vld [vmem:[#allocation11 + $0x80] sm:$0xff]
    %v778 = vld [vmem:[#allocation11 + $0x88] sm:$0xff]
    %v779 = vld [vmem:[#allocation11 + $0x90] sm:$0xff]
    %v780 = vld [vmem:[#allocation11 + $0x98] sm:$0xff]
    %v781 = vld [vmem:[#allocation11 + $0xa0] sm:$0xff]
    %v782 = vld [vmem:[#allocation11 + $0xa8] sm:$0xff]
    %v783 = vld [vmem:[#allocation11 + $0xb0] sm:$0xff]
    %v784 = vld [vmem:[#allocation11 + $0xb8] sm:$0xff]
    %v785 = vld [vmem:[#allocation11 + $0xc0] sm:$0xff]
    %v786 = vld [vmem:[#allocation11 + $0xc8] sm:$0xff]
    %v787 = vld [vmem:[#allocation11 + $0xd0] sm:$0xff]
    %v788 = vld [vmem:[#allocation11 + $0xd8] sm:$0xff]
    %v789 = vld [vmem:[#allocation11 + $0xe0] sm:$0xff]
    %v790 = vld [vmem:[#allocation11 + $0xe8] sm:$0xff]
    %v791 = vld [vmem:[#allocation11 + $0xf0] sm:$0xff]
    %v792 = vld [vmem:[#allocation11 + $0xf8] sm:$0xff]
    %v793 = vld [vmem:[#allocation11 + $0x100] sm:$0xff]
    %v794 = vld [vmem:[#allocation11 + $0x108] sm:$0xff]
    %v795 = vld [vmem:[#allocation11 + $0x110] sm:$0xff]
    %v796 = vld [vmem:[#allocation11 + $0x118] sm:$0xff]
    %v797 = vld [vmem:[#allocation11 + $0x120] sm:$0xff]
    %v798 = vld [vmem:[#allocation11 + $0x128] sm:$0xff]
    %v799 = vld [vmem:[#allocation11 + $0x130] sm:$0xff]
    %v800 = vld [vmem:[#allocation11 + $0x138] sm:$0xff]
    %v801 = vld [vmem:[#allocation11 + $0x140] sm:$0xff]
    %v802 = vld [vmem:[#allocation11 + $0x148] sm:$0xff]
    %v803 = vld [vmem:[#allocation11 + $0x150] sm:$0xff]
    %v804 = vld [vmem:[#allocation11 + $0x158] sm:$0xff]
    %v805 = vld [vmem:[#allocation11 + $0x160] sm:$0xff]
    %v806 = vld [vmem:[#allocation11 + $0x168] sm:$0xff]
    %v807 = vld [vmem:[#allocation11 + $0x170] sm:$0xff]
    %v808 = vld [vmem:[#allocation11 + $0x178] sm:$0xff]
    %v809 = vld [vmem:[#allocation11 + $0x180] sm:$0xff]
    %v810 = vld [vmem:[#allocation11 + $0x188] sm:$0xff]
    %v811 = vld [vmem:[#allocation11 + $0x190] sm:$0xff]
    %v812 = vld [vmem:[#allocation11 + $0x198] sm:$0xff]
    %v813 = vld [vmem:[#allocation11 + $0x1a0] sm:$0xff]
    %v814 = vld [vmem:[#allocation11 + $0x1a8] sm:$0xff]
    %v815 = vld [vmem:[#allocation11 + $0x1b0] sm:$0xff]
    %v816 = vld [vmem:[#allocation11 + $0x1b8] sm:$0xff]
    %v817 = vld [vmem:[#allocation11 + $0x1c0] sm:$0xff]
    %v818 = vld [vmem:[#allocation11 + $0x1c8] sm:$0xff]
    %v819 = vld [vmem:[#allocation11 + $0x1d0] sm:$0xff]
    %v820 = vld [vmem:[#allocation11 + $0x1d8] sm:$0xff]
    %v821 = vld [vmem:[#allocation11 + $0x1e0] sm:$0xff]
    %v822 = vld [vmem:[#allocation11 + $0x1e8] sm:$0xff]
    %v823 = vld [vmem:[#allocation11 + $0x1f0] sm:$0xff]
    %v824 = vld [vmem:[#allocation11 + $0x1f8] sm:$0xff]
    %v825 = vld [vmem:[%s14] sm:$0xf]
    %v827 = vlaneseq
    %v828 = vshrl.u32 %v827, 7
    %v829 = vsub.s32 0, %v828
    %v830 = vrot.slane %v825, %v829
    %v831 = vlaneseq
    %v832 = vshrl.u32 %v831, 7
    %v833 = vsub.s32 1, %v832
    %v834 = vrot.slane %v825, %v833
    %v835 = vlaneseq
    %v836 = vshrl.u32 %v835, 7
    %v837 = vsub.s32 2, %v836
    %v838 = vrot.slane %v825, %v837
    %v839 = vlaneseq
    %v840 = vshrl.u32 %v839, 7
    %v841 = vsub.s32 3, %v840
    %v842 = vrot.slane %v825, %v841
    %v911 = vunpack.c.l.b16 %v761
    %v912 = vunpack.c.h.b16 %v761
    %v913 = vunpack.c.l.b16 %v762
    %v914 = vunpack.c.h.b16 %v762
    %v915 = vunpack.c.l.b16 %v763
    %v916 = vunpack.c.h.b16 %v763
    %v917 = vunpack.c.l.b16 %v764
    %v918 = vunpack.c.h.b16 %v764
    %v919 = vunpack.c.l.b16 %v765
    %v920 = vunpack.c.h.b16 %v765
    %v921 = vunpack.c.l.b16 %v766
    %v922 = vunpack.c.h.b16 %v766
    %v923 = vunpack.c.l.b16 %v767
    %v924 = vunpack.c.h.b16 %v767
    %v925 = vunpack.c.l.b16 %v768
    %v926 = vunpack.c.h.b16 %v768
    %v927 = vunpack.c.l.b16 %v769
    %v928 = vunpack.c.h.b16 %v769
    %v929 = vunpack.c.l.b16 %v770
    %v930 = vunpack.c.h.b16 %v770
    %v931 = vunpack.c.l.b16 %v771
    %v932 = vunpack.c.h.b16 %v771
    %v933 = vunpack.c.l.b16 %v772
    %v934 = vunpack.c.h.b16 %v772
    %v935 = vunpack.c.l.b16 %v773
    %v936 = vunpack.c.h.b16 %v773
    %v937 = vunpack.c.l.b16 %v774
    %v938 = vunpack.c.h.b16 %v774
    %v939 = vunpack.c.l.b16 %v775
    %v940 = vunpack.c.h.b16 %v775
    %v941 = vunpack.c.l.b16 %v776
    %v942 = vunpack.c.h.b16 %v776
    %v943 = vunpack.c.l.b16 %v777
    %v944 = vunpack.c.h.b16 %v777
    %v945 = vunpack.c.l.b16 %v778
    %v946 = vunpack.c.h.b16 %v778
    %v947 = vunpack.c.l.b16 %v779
    %v948 = vunpack.c.h.b16 %v779
    %v949 = vunpack.c.l.b16 %v780
    %v950 = vunpack.c.h.b16 %v780
    %v951 = vunpack.c.l.b16 %v781
    %v952 = vunpack.c.h.b16 %v781
    %v953 = vunpack.c.l.b16 %v782
    %v954 = vunpack.c.h.b16 %v782
    %v955 = vunpack.c.l.b16 %v783
    %v956 = vunpack.c.h.b16 %v783
    %v957 = vunpack.c.l.b16 %v784
    %v958 = vunpack.c.h.b16 %v784
    %v959 = vunpack.c.l.b16 %v785
    %v960 = vunpack.c.h.b16 %v785
    %v961 = vunpack.c.l.b16 %v786
    %v962 = vunpack.c.h.b16 %v786
    %v963 = vunpack.c.l.b16 %v787
    %v964 = vunpack.c.h.b16 %v787
    %v965 = vunpack.c.l.b16 %v788
    %v966 = vunpack.c.h.b16 %v788
    %v967 = vunpack.c.l.b16 %v789
    %v968 = vunpack.c.h.b16 %v789
    %v969 = vunpack.c.l.b16 %v790
    %v970 = vunpack.c.h.b16 %v790
    %v971 = vunpack.c.l.b16 %v791
    %v972 = vunpack.c.h.b16 %v791
    %v973 = vunpack.c.l.b16 %v792
    %v974 = vunpack.c.h.b16 %v792
    %v975 = vunpack.c.l.b16 %v793
    %v976 = vunpack.c.h.b16 %v793
    %v977 = vunpack.c.l.b16 %v794
    %v978 = vunpack.c.h.b16 %v794
    %v979 = vunpack.c.l.b16 %v795
    %v980 = vunpack.c.h.b16 %v795
    %v981 = vunpack.c.l.b16 %v796
    %v982 = vunpack.c.h.b16 %v796
    %v983 = vunpack.c.l.b16 %v797
    %v984 = vunpack.c.h.b16 %v797
    %v985 = vunpack.c.l.b16 %v798
    %v986 = vunpack.c.h.b16 %v798
    %v987 = vunpack.c.l.b16 %v799
    %v988 = vunpack.c.h.b16 %v799
    %v989 = vunpack.c.l.b16 %v800
    %v990 = vunpack.c.h.b16 %v800
    %v991 = vunpack.c.l.b16 %v801
    %v992 = vunpack.c.h.b16 %v801
    %v993 = vunpack.c.l.b16 %v802
    %v994 = vunpack.c.h.b16 %v802
    %v995 = vunpack.c.l.b16 %v803
    %v996 = vunpack.c.h.b16 %v803
    %v997 = vunpack.c.l.b16 %v804
    %v998 = vunpack.c.h.b16 %v804
    %v999 = vunpack.c.l.b16 %v805
    %v1000 = vunpack.c.h.b16 %v805
    %v1001 = vunpack.c.l.b16 %v806
    %v1002 = vunpack.c.h.b16 %v806
    %v1003 = vunpack.c.l.b16 %v807
    %v1004 = vunpack.c.h.b16 %v807
    %v1005 = vunpack.c.l.b16 %v808
    %v1006 = vunpack.c.h.b16 %v808
    %v1007 = vunpack.c.l.b16 %v809
    %v1008 = vunpack.c.h.b16 %v809
    %v1009 = vunpack.c.l.b16 %v810
    %v1010 = vunpack.c.h.b16 %v810
    %v1011 = vunpack.c.l.b16 %v811
    %v1012 = vunpack.c.h.b16 %v811
    %v1013 = vunpack.c.l.b16 %v812
    %v1014 = vunpack.c.h.b16 %v812
    %v1015 = vunpack.c.l.b16 %v813
    %v1016 = vunpack.c.h.b16 %v813
    %v1017 = vunpack.c.l.b16 %v814
    %v1018 = vunpack.c.h.b16 %v814
    %v1019 = vunpack.c.l.b16 %v815
    %v1020 = vunpack.c.h.b16 %v815
    %v1021 = vunpack.c.l.b16 %v816
    %v1022 = vunpack.c.h.b16 %v816
    %v1023 = vunpack.c.l.b16 %v817
    %v1024 = vunpack.c.h.b16 %v817
    %v1025 = vunpack.c.l.b16 %v818
    %v1026 = vunpack.c.h.b16 %v818
    %v1027 = vunpack.c.l.b16 %v819
    %v1028 = vunpack.c.h.b16 %v819
    %v1029 = vunpack.c.l.b16 %v820
    %v1030 = vunpack.c.h.b16 %v820
    %v1031 = vunpack.c.l.b16 %v821
    %v1032 = vunpack.c.h.b16 %v821
    %v1033 = vunpack.c.l.b16 %v822
    %v1034 = vunpack.c.h.b16 %v822
    %v1035 = vunpack.c.l.b16 %v823
    %v1036 = vunpack.c.h.b16 %v823
    %v1037 = vunpack.c.l.b16 %v824
    %v1038 = vunpack.c.h.b16 %v824
    %v1039 = vpack.c.b16 %v915, %v911
    %v1040 = vpack.c.b16 %v916, %v912
    %v1041 = vpack.c.b16 %v917, %v913
    %v1042 = vpack.c.b16 %v918, %v914
    %v1043 = vpack.c.b16 %v923, %v919
    %v1044 = vpack.c.b16 %v924, %v920
    %v1045 = vpack.c.b16 %v925, %v921
    %v1046 = vpack.c.b16 %v926, %v922
    %v1047 = vpack.c.b16 %v931, %v927
    %v1048 = vpack.c.b16 %v932, %v928
    %v1049 = vpack.c.b16 %v933, %v929
    %v1050 = vpack.c.b16 %v934, %v930
    %v1051 = vpack.c.b16 %v939, %v935
    %v1052 = vpack.c.b16 %v940, %v936
    %v1053 = vpack.c.b16 %v941, %v937
    %v1054 = vpack.c.b16 %v942, %v938
    %v1055 = vpack.c.b16 %v947, %v943
    %v1056 = vpack.c.b16 %v948, %v944
    %v1057 = vpack.c.b16 %v949, %v945
    %v1058 = vpack.c.b16 %v950, %v946
    %v1059 = vpack.c.b16 %v955, %v951
    %v1060 = vpack.c.b16 %v956, %v952
    %v1061 = vpack.c.b16 %v957, %v953
    %v1062 = vpack.c.b16 %v958, %v954
    %v1063 = vpack.c.b16 %v963, %v959
    %v1064 = vpack.c.b16 %v964, %v960
    %v1065 = vpack.c.b16 %v965, %v961
    %v1066 = vpack.c.b16 %v966, %v962
    %v1067 = vpack.c.b16 %v971, %v967
    %v1068 = vpack.c.b16 %v972, %v968
    %v1069 = vpack.c.b16 %v973, %v969
    %v1070 = vpack.c.b16 %v974, %v970
    %v1071 = vpack.c.b16 %v979, %v975
    %v1072 = vpack.c.b16 %v980, %v976
    %v1073 = vpack.c.b16 %v981, %v977
    %v1074 = vpack.c.b16 %v982, %v978
    %v1075 = vpack.c.b16 %v987, %v983
    %v1076 = vpack.c.b16 %v988, %v984
    %v1077 = vpack.c.b16 %v989, %v985
    %v1078 = vpack.c.b16 %v990, %v986
    %v1079 = vpack.c.b16 %v995, %v991
    %v1080 = vpack.c.b16 %v996, %v992
    %v1081 = vpack.c.b16 %v997, %v993
    %v1082 = vpack.c.b16 %v998, %v994
    %v1083 = vpack.c.b16 %v1003, %v999
    %v1084 = vpack.c.b16 %v1004, %v1000
    %v1085 = vpack.c.b16 %v1005, %v1001
    %v1086 = vpack.c.b16 %v1006, %v1002
    %v1087 = vpack.c.b16 %v1011, %v1007
    %v1088 = vpack.c.b16 %v1012, %v1008
    %v1089 = vpack.c.b16 %v1013, %v1009
    %v1090 = vpack.c.b16 %v1014, %v1010
    %v1091 = vpack.c.b16 %v1019, %v1015
    %v1092 = vpack.c.b16 %v1020, %v1016
    %v1093 = vpack.c.b16 %v1021, %v1017
    %v1094 = vpack.c.b16 %v1022, %v1018
    %v1095 = vpack.c.b16 %v1027, %v1023
    %v1096 = vpack.c.b16 %v1028, %v1024
    %v1097 = vpack.c.b16 %v1029, %v1025
    %v1098 = vpack.c.b16 %v1030, %v1026
    %v1099 = vpack.c.b16 %v1035, %v1031
    %v1100 = vpack.c.b16 %v1036, %v1032
    %v1101 = vpack.c.b16 %v1037, %v1033
    %v1102 = vpack.c.b16 %v1038, %v1034
    %1167 = vmatprep.subr.bf16.mxu0 %v1040
    %1168 = vmatpush1.bf16.msra.mxu0 %v1039
    %1169 = vmatprep.subr.bf16.mxu0 %v1044
    %1170 = vmatpush1.bf16.msra.mxu0 %v1043
    %1171 = vmatprep.subr.bf16.mxu0 %v1048
    %1172 = vmatpush1.bf16.msra.mxu0 %v1047
    %1173 = vmatprep.subr.bf16.mxu0 %v1052
    %1174 = vmatpush1.bf16.msra.mxu0 %v1051
    %1175 = vmatprep.subr.bf16.mxu0 %v1056
    %1176 = vmatpush1.bf16.msra.mxu0 %v1055
    %1177 = vmatprep.subr.bf16.mxu0 %v1060
    %1178 = vmatpush1.bf16.msra.mxu0 %v1059
    %1179 = vmatprep.subr.bf16.mxu0 %v1064
    %1180 = vmatpush1.bf16.msra.mxu0 %v1063
    %1181 = vmatprep.subr.bf16.mxu0 %v1068
    %1182 = vmatpush1.bf16.msra.mxu0 %v1067
    %1183 = vmatprep.subr.bf16.mxu0 %v1072
    %1184 = vmatpush1.bf16.msra.mxu0 %v1071
    %1185 = vmatprep.subr.bf16.mxu0 %v1076
    %1186 = vmatpush1.bf16.msra.mxu0 %v1075
    %1187 = vmatprep.subr.bf16.mxu0 %v1080
    %1188 = vmatpush1.bf16.msra.mxu0 %v1079
    %1189 = vmatprep.subr.bf16.mxu0 %v1084
    %1190 = vmatpush1.bf16.msra.mxu0 %v1083
    %1191 = vmatprep.subr.bf16.mxu0 %v1088
    %1192 = vmatpush1.bf16.msra.mxu0 %v1087
    %1193 = vmatprep.subr.bf16.mxu0 %v1092
    %1194 = vmatpush1.bf16.msra.mxu0 %v1091
    %1195 = vmatprep.subr.bf16.mxu0 %v1096
    %1196 = vmatpush1.bf16.msra.mxu0 %v1095
    %1197 = vmatprep.subr.bf16.mxu0 %v1100
    %1198 = vmatpush1.bf16.msra.mxu0 %v1099
    %1199 = vmatprep.mubr.bf16.mxu0 %v758
    %1200 = vmatmul.mubr.bf16.gmra.mrb[0].mxu0 %v757
    %v1201 = vpop.f32.mrb[0].mxu0
    %v1202 = vadd.f32 %v830, %v1201
    %v1203 = vpop.f32.mrb[0].mxu0
    %v1204 = vadd.f32 %v834, %v1203
    %v1205 = vpop.f32.mrb[0].mxu0
    %v1206 = vadd.f32 %v830, %v1205
    %v1207 = vpop.f32.mrb[0].mxu0
    %v1208 = vadd.f32 %v834, %v1207
    %1209 = vmatprep.mubr.bf16.mxu0 %v760
    %1210 = vmatmul.mubr.bf16.gmra.mrb[0].mxu0 %v759
    %v1211 = vpop.f32.mrb[0].mxu0
    %v1212 = vadd.f32 %v830, %v1211
    %v1213 = vpop.f32.mrb[0].mxu0
    %v1214 = vadd.f32 %v834, %v1213
    %v1215 = vpop.f32.mrb[0].mxu0
    %v1216 = vadd.f32 %v830, %v1215
    %v1217 = vpop.f32.mrb[0].mxu0
    %v1218 = vadd.f32 %v834, %v1217
    %1219 = vdwg.mxu0
    %1220 = vmatprep.subr.bf16.mxu0 %v1042
    %1221 = vmatpush1.bf16.msra.mxu0 %v1041
    %1222 = vmatprep.subr.bf16.mxu0 %v1046
    %1223 = vmatpush1.bf16.msra.mxu0 %v1045
    %1224 = vmatprep.subr.bf16.mxu0 %v1050
    %1225 = vmatpush1.bf16.msra.mxu0 %v1049
    %1226 = vmatprep.subr.bf16.mxu0 %v1054
    %1227 = vmatpush1.bf16.msra.mxu0 %v1053
    %1228 = vmatprep.subr.bf16.mxu0 %v1058
    %1229 = vmatpush1.bf16.msra.mxu0 %v1057
    %1230 = vmatprep.subr.bf16.mxu0 %v1062
    %1231 = vmatpush1.bf16.msra.mxu0 %v1061
    %1232 = vmatprep.subr.bf16.mxu0 %v1066
    %1233 = vmatpush1.bf16.msra.mxu0 %v1065
    %1234 = vmatprep.subr.bf16.mxu0 %v1070
    %1235 = vmatpush1.bf16.msra.mxu0 %v1069
    %1236 = vmatprep.subr.bf16.mxu0 %v1074
    %1237 = vmatpush1.bf16.msra.mxu0 %v1073
    %1238 = vmatprep.subr.bf16.mxu0 %v1078
    %1239 = vmatpush1.bf16.msra.mxu0 %v1077
    %1240 = vmatprep.subr.bf16.mxu0 %v1082
    %1241 = vmatpush1.bf16.msra.mxu0 %v1081
    %1242 = vmatprep.subr.bf16.mxu0 %v1086
    %1243 = vmatpush1.bf16.msra.mxu0 %v1085
    %1244 = vmatprep.subr.bf16.mxu0 %v1090
    %1245 = vmatpush1.bf16.msra.mxu0 %v1089
    %1246 = vmatprep.subr.bf16.mxu0 %v1094
    %1247 = vmatpush1.bf16.msra.mxu0 %v1093
    %1248 = vmatprep.subr.bf16.mxu0 %v1098
    %1249 = vmatpush1.bf16.msra.mxu0 %v1097
    %1250 = vmatprep.subr.bf16.mxu0 %v1102
    %1251 = vmatpush1.bf16.msra.mxu0 %v1101
    %1252 = vmatprep.mubr.bf16.mxu0 %v758
    %1253 = vmatmul.mubr.bf16.gmra.mrb[0].mxu0 %v757
    %v1254 = vpop.f32.mrb[0].mxu0
    %v1255 = vadd.f32 %v838, %v1254
    %v1256 = vpop.f32.mrb[0].mxu0
    %v1257 = vadd.f32 %v842, %v1256
    %v1258 = vpop.f32.mrb[0].mxu0
    %v1259 = vadd.f32 %v838, %v1258
    %v1260 = vpop.f32.mrb[0].mxu0
    %v1261 = vadd.f32 %v842, %v1260
    %1262 = vmatprep.mubr.bf16.mxu0 %v760
    %1263 = vmatmul.mubr.bf16.gmra.mrb[0].mxu0 %v759
    %v1264 = vpop.f32.mrb[0].mxu0
    %v1265 = vadd.f32 %v838, %v1264
    %v1266 = vpop.f32.mrb[0].mxu0
    %v1267 = vadd.f32 %v842, %v1266
    %v1268 = vpop.f32.mrb[0].mxu0
    %v1269 = vadd.f32 %v838, %v1268
    %v1270 = vpop.f32.mrb[0].mxu0
    %v1271 = vadd.f32 %v842, %v1270
    %1272 = vdwg.mxu0
    %v1273 = vmax.f32 %v1202, 0.0
    %v1274 = vmax.f32 %v1204, 0.0
    %v1275 = vmax.f32 %v1255, 0.0
    %v1276 = vmax.f32 %v1257, 0.0
    %v1277 = vmax.f32 %v1206, 0.0
    %v1278 = vmax.f32 %v1208, 0.0
    %v1279 = vmax.f32 %v1259, 0.0
    %v1280 = vmax.f32 %v1261, 0.0
    %v1281 = vmax.f32 %v1212, 0.0
    %v1282 = vmax.f32 %v1214, 0.0
    %v1283 = vmax.f32 %v1265, 0.0
    %v1284 = vmax.f32 %v1267, 0.0
    %v1285 = vmax.f32 %v1216, 0.0
    %v1286 = vmax.f32 %v1218, 0.0
    %v1287 = vmax.f32 %v1269, 0.0
    %v1288 = vmax.f32 %v1271, 0.0
    %v1289 = vpack.c.bf16 %v1277, %v1273
    %v1290 = vpack.c.bf16 %v1278, %v1274
    %v1291 = vpack.c.bf16 %v1279, %v1275
    %v1292 = vpack.c.bf16 %v1280, %v1276
    %v1293 = vpack.c.bf16 %v1285, %v1281
    %v1294 = vpack.c.bf16 %v1286, %v1282
    %v1295 = vpack.c.bf16 %v1287, %v1283
    %v1296 = vpack.c.bf16 %v1288, %v1284
    %v1305 = vunpack.c.l.b16 %v1289
    %v1306 = vunpack.c.l.b16 %v1290
    %v1307 = vunpack.c.l.b16 %v1291
    %v1308 = vunpack.c.l.b16 %v1292
    %v1309 = vunpack.c.h.b16 %v1289
    %v1310 = vunpack.c.h.b16 %v1290
    %v1311 = vunpack.c.h.b16 %v1291
    %v1312 = vunpack.c.h.b16 %v1292
    %v1313 = vunpack.c.l.b16 %v1293
    %v1314 = vunpack.c.l.b16 %v1294
    %v1315 = vunpack.c.l.b16 %v1295
    %v1316 = vunpack.c.l.b16 %v1296
    %v1317 = vunpack.c.h.b16 %v1293
    %v1318 = vunpack.c.h.b16 %v1294
    %v1319 = vunpack.c.h.b16 %v1295
    %v1320 = vunpack.c.h.b16 %v1296
    %v1321 = vpack.c.b16 %v1306, %v1305
    %v1322 = vpack.c.b16 %v1308, %v1307
    %v1323 = vpack.c.b16 %v1310, %v1309
    %v1324 = vpack.c.b16 %v1312, %v1311
    %v1325 = vpack.c.b16 %v1314, %v1313
    %v1326 = vpack.c.b16 %v1316, %v1315
    %v1327 = vpack.c.b16 %v1318, %v1317
    %v1328 = vpack.c.b16 %v1320, %v1319
    %1337 = vst [vmem:[#allocation14] sm:$0xff] %v1321
    %1338 = vst [vmem:[#allocation14 + $0x8] sm:$0xff] %v1322
    %1339 = vst [vmem:[#allocation14 + $0x10] sm:$0xff] %v1323
    %1340 = vst [vmem:[#allocation14 + $0x18] sm:$0xff] %v1324
    %1341 = vst [vmem:[#allocation14 + $0x20] sm:$0xff] %v1325
    %1342 = vst [vmem:[#allocation14 + $0x28] sm:$0xff] %v1326
    %1343 = vst [vmem:[#allocation14 + $0x30] sm:$0xff] %v1327
    %1344 = vst [vmem:[#allocation14 + $0x38] sm:$0xff] %v1328
    %v1345 = vld [vmem:[#allocation13] sm:$0xf]
    %v1346 = vld [vmem:[#allocation13 + $0x4] sm:$0xf]
    %v1347 = vld [vmem:[#allocation13 + $0x8] sm:$0xf]
    %v1348 = vld [vmem:[#allocation13 + $0xc] sm:$0xf]
    %v1349 = vld [vmem:[#allocation13 + $0x10] sm:$0xf]
    %v1350 = vld [vmem:[#allocation13 + $0x14] sm:$0xf]
    %v1351 = vld [vmem:[#allocation13 + $0x18] sm:$0xf]
    %v1352 = vld [vmem:[#allocation13 + $0x1c] sm:$0xf]
    %v1353 = vld [vmem:[#allocation13 + $0x20] sm:$0xf]
    %v1354 = vld [vmem:[#allocation13 + $0x24] sm:$0xf]
    %v1355 = vld [vmem:[#allocation13 + $0x28] sm:$0xf]
    %v1356 = vld [vmem:[#allocation13 + $0x2c] sm:$0xf]
    %v1357 = vld [vmem:[#allocation13 + $0x30] sm:$0xf]
    %v1358 = vld [vmem:[#allocation13 + $0x34] sm:$0xf]
    %v1359 = vld [vmem:[#allocation13 + $0x38] sm:$0xf]
    %v1360 = vld [vmem:[#allocation13 + $0x3c] sm:$0xf]
    %v1361 = vld [vmem:[#allocation13 + $0x40] sm:$0xf]
    %v1362 = vld [vmem:[#allocation13 + $0x44] sm:$0xf]
    %v1363 = vld [vmem:[#allocation13 + $0x48] sm:$0xf]
    %v1364 = vld [vmem:[#allocation13 + $0x4c] sm:$0xf]
    %v1365 = vld [vmem:[#allocation13 + $0x50] sm:$0xf]
    %v1366 = vld [vmem:[#allocation13 + $0x54] sm:$0xf]
    %v1367 = vld [vmem:[#allocation13 + $0x58] sm:$0xf]
    %v1368 = vld [vmem:[#allocation13 + $0x5c] sm:$0xf]
    %v1369 = vld [vmem:[#allocation13 + $0x60] sm:$0xf]
    %v1370 = vld [vmem:[#allocation13 + $0x64] sm:$0xf]
    %v1371 = vld [vmem:[#allocation13 + $0x68] sm:$0xf]
    %v1372 = vld [vmem:[#allocation13 + $0x6c] sm:$0xf]
    %v1373 = vld [vmem:[#allocation13 + $0x70] sm:$0xf]
    %v1374 = vld [vmem:[#allocation13 + $0x74] sm:$0xf]
    %v1375 = vld [vmem:[#allocation13 + $0x78] sm:$0xf]
    %v1376 = vld [vmem:[#allocation13 + $0x7c] sm:$0xf]
    %v1377 = vld [vmem:[#allocation13 + $0x80] sm:$0xf]
    %v1378 = vld [vmem:[#allocation13 + $0x84] sm:$0xf]
    %v1379 = vld [vmem:[#allocation13 + $0x88] sm:$0xf]
    %v1380 = vld [vmem:[#allocation13 + $0x8c] sm:$0xf]
    %v1381 = vld [vmem:[#allocation13 + $0x90] sm:$0xf]
    %v1382 = vld [vmem:[#allocation13 + $0x94] sm:$0xf]
    %v1383 = vld [vmem:[#allocation13 + $0x98] sm:$0xf]
    %v1384 = vld [vmem:[#allocation13 + $0x9c] sm:$0xf]
    %v1385 = vld [vmem:[#allocation13 + $0xa0] sm:$0xf]
    %v1386 = vld [vmem:[#allocation13 + $0xa4] sm:$0xf]
    %v1387 = vld [vmem:[#allocation13 + $0xa8] sm:$0xf]
    %v1388 = vld [vmem:[#allocation13 + $0xac] sm:$0xf]
    %v1389 = vld [vmem:[#allocation13 + $0xb0] sm:$0xf]
    %v1390 = vld [vmem:[#allocation13 + $0xb4] sm:$0xf]
    %v1391 = vld [vmem:[#allocation13 + $0xb8] sm:$0xf]
    %v1392 = vld [vmem:[#allocation13 + $0xbc] sm:$0xf]
    %v1393 = vld [vmem:[#allocation13 + $0xc0] sm:$0xf]
    %v1394 = vld [vmem:[#allocation13 + $0xc4] sm:$0xf]
    %v1395 = vld [vmem:[#allocation13 + $0xc8] sm:$0xf]
    %v1396 = vld [vmem:[#allocation13 + $0xcc] sm:$0xf]
    %v1397 = vld [vmem:[#allocation13 + $0xd0] sm:$0xf]
    %v1398 = vld [vmem:[#allocation13 + $0xd4] sm:$0xf]
    %v1399 = vld [vmem:[#allocation13 + $0xd8] sm:$0xf]
    %v1400 = vld [vmem:[#allocation13 + $0xdc] sm:$0xf]
    %v1401 = vld [vmem:[#allocation13 + $0xe0] sm:$0xf]
    %v1402 = vld [vmem:[#allocation13 + $0xe4] sm:$0xf]
    %v1403 = vld [vmem:[#allocation13 + $0xe8] sm:$0xf]
    %v1404 = vld [vmem:[#allocation13 + $0xec] sm:$0xf]
    %v1405 = vld [vmem:[#allocation13 + $0xf0] sm:$0xf]
    %v1406 = vld [vmem:[#allocation13 + $0xf4] sm:$0xf]
    %v1407 = vld [vmem:[#allocation13 + $0xf8] sm:$0xf]
    %v1408 = vld [vmem:[#allocation13 + $0xfc] sm:$0xf]
    %v1409 = vld [vmem:[%s16] sm:$0x1]
    %v1411 = vlaneseq
    %v1412 = vshrl.u32 %v1411, 7
    %v1413 = vsub.s32 0, %v1412
    %v1414 = vrot.slane %v1409, %v1413
    %v1480 = vunpack.c.l.b16 %v1345
    %v1481 = vunpack.c.l.b16 %v1346
    %v1482 = vunpack.c.l.b16 %v1347
    %v1483 = vunpack.c.l.b16 %v1348
    %v1484 = vunpack.c.l.b16 %v1349
    %v1485 = vunpack.c.l.b16 %v1350
    %v1486 = vunpack.c.l.b16 %v1351
    %v1487 = vunpack.c.l.b16 %v1352
    %v1488 = vunpack.c.l.b16 %v1353
    %v1489 = vunpack.c.l.b16 %v1354
    %v1490 = vunpack.c.l.b16 %v1355
    %v1491 = vunpack.c.l.b16 %v1356
    %v1492 = vunpack.c.l.b16 %v1357
    %v1493 = vunpack.c.l.b16 %v1358
    %v1494 = vunpack.c.l.b16 %v1359
    %v1495 = vunpack.c.l.b16 %v1360
    %v1496 = vunpack.c.l.b16 %v1361
    %v1497 = vunpack.c.l.b16 %v1362
    %v1498 = vunpack.c.l.b16 %v1363
    %v1499 = vunpack.c.l.b16 %v1364
    %v1500 = vunpack.c.l.b16 %v1365
    %v1501 = vunpack.c.l.b16 %v1366
    %v1502 = vunpack.c.l.b16 %v1367
    %v1503 = vunpack.c.l.b16 %v1368
    %v1504 = vunpack.c.l.b16 %v1369
    %v1505 = vunpack.c.l.b16 %v1370
    %v1506 = vunpack.c.l.b16 %v1371
    %v1507 = vunpack.c.l.b16 %v1372
    %v1508 = vunpack.c.l.b16 %v1373
    %v1509 = vunpack.c.l.b16 %v1374
    %v1510 = vunpack.c.l.b16 %v1375
    %v1511 = vunpack.c.l.b16 %v1376
    %v1512 = vunpack.c.l.b16 %v1377
    %v1513 = vunpack.c.l.b16 %v1378
    %v1514 = vunpack.c.l.b16 %v1379
    %v1515 = vunpack.c.l.b16 %v1380
    %v1516 = vunpack.c.l.b16 %v1381
    %v1517 = vunpack.c.l.b16 %v1382
    %v1518 = vunpack.c.l.b16 %v1383
    %v1519 = vunpack.c.l.b16 %v1384
    %v1520 = vunpack.c.l.b16 %v1385
    %v1521 = vunpack.c.l.b16 %v1386
    %v1522 = vunpack.c.l.b16 %v1387
    %v1523 = vunpack.c.l.b16 %v1388
    %v1524 = vunpack.c.l.b16 %v1389
    %v1525 = vunpack.c.l.b16 %v1390
    %v1526 = vunpack.c.l.b16 %v1391
    %v1527 = vunpack.c.l.b16 %v1392
    %v1528 = vunpack.c.l.b16 %v1393
    %v1529 = vunpack.c.l.b16 %v1394
    %v1530 = vunpack.c.l.b16 %v1395
    %v1531 = vunpack.c.l.b16 %v1396
    %v1532 = vunpack.c.l.b16 %v1397
    %v1533 = vunpack.c.l.b16 %v1398
    %v1534 = vunpack.c.l.b16 %v1399
    %v1535 = vunpack.c.l.b16 %v1400
    %v1536 = vunpack.c.l.b16 %v1401
    %v1537 = vunpack.c.l.b16 %v1402
    %v1538 = vunpack.c.l.b16 %v1403
    %v1539 = vunpack.c.l.b16 %v1404
    %v1540 = vunpack.c.l.b16 %v1405
    %v1541 = vunpack.c.l.b16 %v1406
    %v1542 = vunpack.c.l.b16 %v1407
    %v1543 = vunpack.c.l.b16 %v1408
    %v1544 = vpack.c.b16 %v1481, %v1480
    %v1545 = vpack.c.b16 %v1483, %v1482
    %v1546 = vpack.c.b16 %v1485, %v1484
    %v1547 = vpack.c.b16 %v1487, %v1486
    %v1548 = vpack.c.b16 %v1489, %v1488
    %v1549 = vpack.c.b16 %v1491, %v1490
    %v1550 = vpack.c.b16 %v1493, %v1492
    %v1551 = vpack.c.b16 %v1495, %v1494
    %v1552 = vpack.c.b16 %v1497, %v1496
    %v1553 = vpack.c.b16 %v1499, %v1498
    %v1554 = vpack.c.b16 %v1501, %v1500
    %v1555 = vpack.c.b16 %v1503, %v1502
    %v1556 = vpack.c.b16 %v1505, %v1504
    %v1557 = vpack.c.b16 %v1507, %v1506
    %v1558 = vpack.c.b16 %v1509, %v1508
    %v1559 = vpack.c.b16 %v1511, %v1510
    %v1560 = vpack.c.b16 %v1513, %v1512
    %v1561 = vpack.c.b16 %v1515, %v1514
    %v1562 = vpack.c.b16 %v1517, %v1516
    %v1563 = vpack.c.b16 %v1519, %v1518
    %v1564 = vpack.c.b16 %v1521, %v1520
    %v1565 = vpack.c.b16 %v1523, %v1522
    %v1566 = vpack.c.b16 %v1525, %v1524
    %v1567 = vpack.c.b16 %v1527, %v1526
    %v1568 = vpack.c.b16 %v1529, %v1528
    %v1569 = vpack.c.b16 %v1531, %v1530
    %v1570 = vpack.c.b16 %v1533, %v1532
    %v1571 = vpack.c.b16 %v1535, %v1534
    %v1572 = vpack.c.b16 %v1537, %v1536
    %v1573 = vpack.c.b16 %v1539, %v1538
    %v1574 = vpack.c.b16 %v1541, %v1540
    %v1575 = vpack.c.b16 %v1543, %v1542
    %1608 = vmatprep.subr.bf16.mxu0 0
    %1609 = vmatpush1.bf16.msra.mxu0 %v1544
    %1610 = vmatprep.subr.bf16.mxu0 0
    %1611 = vmatpush1.bf16.msra.mxu0 %v1545
    %1612 = vmatprep.subr.bf16.mxu0 0
    %1613 = vmatpush1.bf16.msra.mxu0 %v1546
    %1614 = vmatprep.subr.bf16.mxu0 0
    %1615 = vmatpush1.bf16.msra.mxu0 %v1547
    %1616 = vmatprep.subr.bf16.mxu0 0
    %1617 = vmatpush1.bf16.msra.mxu0 %v1548
    %1618 = vmatprep.subr.bf16.mxu0 0
    %1619 = vmatpush1.bf16.msra.mxu0 %v1549
    %1620 = vmatprep.subr.bf16.mxu0 0
    %1621 = vmatpush1.bf16.msra.mxu0 %v1550
    %1622 = vmatprep.subr.bf16.mxu0 0
    %1623 = vmatpush1.bf16.msra.mxu0 %v1551
    %1624 = vmatprep.subr.bf16.mxu0 0
    %1625 = vmatpush1.bf16.msra.mxu0 %v1552
    %1626 = vmatprep.subr.bf16.mxu0 0
    %1627 = vmatpush1.bf16.msra.mxu0 %v1553
    %1628 = vmatprep.subr.bf16.mxu0 0
    %1629 = vmatpush1.bf16.msra.mxu0 %v1554
    %1630 = vmatprep.subr.bf16.mxu0 0
    %1631 = vmatpush1.bf16.msra.mxu0 %v1555
    %1632 = vmatprep.subr.bf16.mxu0 0
    %1633 = vmatpush1.bf16.msra.mxu0 %v1556
    %1634 = vmatprep.subr.bf16.mxu0 0
    %1635 = vmatpush1.bf16.msra.mxu0 %v1557
    %1636 = vmatprep.subr.bf16.mxu0 0
    %1637 = vmatpush1.bf16.msra.mxu0 %v1558
    %1638 = vmatprep.subr.bf16.mxu0 0
    %1639 = vmatpush1.bf16.msra.mxu0 %v1559
    %1640 = vmatprep.mubr.bf16.mxu0 %v1290
    %1641 = vmatmul.mubr.bf16.gmra.mrb[0].mxu0 %v1289
    %v1642 = vpop.f32.mrb[0].mxu0
    %v1643 = vadd.f32 %v1414, %v1642
    %v1644 = vpop.f32.mrb[0].mxu0
    %v1645 = vpop.f32.mrb[0].mxu0
    %v1646 = vadd.f32 %v1414, %v1645
    %v1647 = vpop.f32.mrb[0].mxu0
    %1648 = vmatprep.mubr.bf16.mxu0 %v1294
    %1649 = vmatmul.mubr.bf16.gmra.mrb[0].mxu0 %v1293
    %v1650 = vpop.f32.mrb[0].mxu0
    %v1651 = vadd.f32 %v1414, %v1650
    %v1652 = vpop.f32.mrb[0].mxu0
    %v1653 = vpop.f32.mrb[0].mxu0
    %v1654 = vadd.f32 %v1414, %v1653
    %v1655 = vpop.f32.mrb[0].mxu0
    %1656 = vdwg.mxu0
    %1657 = vmatprep.subr.bf16.mxu0 0
    %1658 = vmatpush1.bf16.msra.mxu0 %v1560
    %1659 = vmatprep.subr.bf16.mxu0 0
    %1660 = vmatpush1.bf16.msra.mxu0 %v1561
    %1661 = vmatprep.subr.bf16.mxu0 0
    %1662 = vmatpush1.bf16.msra.mxu0 %v1562
    %1663 = vmatprep.subr.bf16.mxu0 0
    %1664 = vmatpush1.bf16.msra.mxu0 %v1563
    %1665 = vmatprep.subr.bf16.mxu0 0
    %1666 = vmatpush1.bf16.msra.mxu0 %v1564
    %1667 = vmatprep.subr.bf16.mxu0 0
    %1668 = vmatpush1.bf16.msra.mxu0 %v1565
    %1669 = vmatprep.subr.bf16.mxu0 0
    %1670 = vmatpush1.bf16.msra.mxu0 %v1566
    %1671 = vmatprep.subr.bf16.mxu0 0
    %1672 = vmatpush1.bf16.msra.mxu0 %v1567
    %1673 = vmatprep.subr.bf16.mxu0 0
    %1674 = vmatpush1.bf16.msra.mxu0 %v1568
    %1675 = vmatprep.subr.bf16.mxu0 0
    %1676 = vmatpush1.bf16.msra.mxu0 %v1569
    %1677 = vmatprep.subr.bf16.mxu0 0
    %1678 = vmatpush1.bf16.msra.mxu0 %v1570
    %1679 = vmatprep.subr.bf16.mxu0 0
    %1680 = vmatpush1.bf16.msra.mxu0 %v1571
    %1681 = vmatprep.subr.bf16.mxu0 0
    %1682 = vmatpush1.bf16.msra.mxu0 %v1572
    %1683 = vmatprep.subr.bf16.mxu0 0
    %1684 = vmatpush1.bf16.msra.mxu0 %v1573
    %1685 = vmatprep.subr.bf16.mxu0 0
    %1686 = vmatpush1.bf16.msra.mxu0 %v1574
    %1687 = vmatprep.subr.bf16.mxu0 0
    %1688 = vmatpush1.bf16.msra.mxu0 %v1575
    %1689 = vmatprep.mubr.bf16.mxu0 %v1292
    %1690 = vmatmul.mubr.bf16.gmra.mrb[0].mxu0 %v1291
    %v1691 = vpop.f32.mrb[0].mxu0
    %v1692 = vadd.f32 %v1643, %v1691
    %v1693 = vpop.f32.mrb[0].mxu0
    %v1694 = vpop.f32.mrb[0].mxu0
    %v1695 = vadd.f32 %v1646, %v1694
    %v1696 = vpop.f32.mrb[0].mxu0
    %1697 = vmatprep.mubr.bf16.mxu0 %v1296
    %1698 = vmatmul.mubr.bf16.gmra.mrb[0].mxu0 %v1295
    %v1699 = vpop.f32.mrb[0].mxu0
    %v1700 = vadd.f32 %v1651, %v1699
    %v1701 = vpop.f32.mrb[0].mxu0
    %v1702 = vpop.f32.mrb[0].mxu0
    %v1703 = vadd.f32 %v1654, %v1702
    %v1704 = vpop.f32.mrb[0].mxu0
    %1705 = vdwg.mxu0
    %v1706 = vand.u32 2147483647, %v1692
    %v1707 = vand.u32 2147483647, %v1695
    %v1708 = vand.u32 2147483647, %v1700
    %v1709 = vand.u32 2147483647, %v1703
    %v1710 = vsub.f32 0.0, %v1706
    %v1711 = vsub.f32 0.0, %v1707
    %v1712 = vsub.f32 0.0, %v1708
    %v1713 = vsub.f32 0.0, %v1709
    %v1714 = vmul.f32 %v1710, 1.442695
    %v1715 = vpow.pop %v1714
    %v1716 = vmul.f32 %v1711, 1.442695
    %v1717 = vpow.pop %v1716
    %v1718 = vmul.f32 %v1712, 1.442695
    %v1719 = vpow.pop %v1718
    %v1720 = vmul.f32 %v1713, 1.442695
    %v1721 = vpow.pop %v1720
    %v1722 = vadd.f32 %v1715, 1.0
    %v1723 = vadd.f32 %v1717, 1.0
    %v1724 = vadd.f32 %v1719, 1.0
    %v1725 = vadd.f32 %v1721, 1.0
    %v1726 = vrcp.pop %v1722
    %v1727 = vmul.f32 1.0, %v1726
    %v1728 = vrcp.pop %v1723
    %v1729 = vmul.f32 1.0, %v1728
    %v1730 = vrcp.pop %v1724
    %v1731 = vmul.f32 1.0, %v1730
    %v1732 = vrcp.pop %v1725
    %v1733 = vmul.f32 1.0, %v1732
    %vm1734 = vcmp.ge.f32.partialorder %v1692, 0.0
    %vm1735 = vcmp.ge.f32.partialorder %v1695, 0.0
    %vm1736 = vcmp.ge.f32.partialorder %v1700, 0.0
    %vm1737 = vcmp.ge.f32.partialorder %v1703, 0.0
    %v1738 = vmul.f32 %v1715, %v1727
    %v1739 = vmul.f32 %v1717, %v1729
    %v1740 = vmul.f32 %v1719, %v1731
    %v1741 = vmul.f32 %v1721, %v1733
    %v1742 = vsel %vm1734, %v1727, %v1738
    %v1743 = vsel %vm1735, %v1729, %v1739
    %v1744 = vsel %vm1736, %v1731, %v1740
    %v1745 = vsel %vm1737, %v1733, %v1741
    %v1746 = vlaneseq
    %v1747 = vand.u32 %v1746, 127
    %vm1748 = vcmp.ge.s32.totalorder %v1747, 1
    %vm1749 = vcmp.lt.s32.totalorder %v1747, 5
    %vm1750 = vmand %vm1748, %vm1749
    %v1751 = vsel %vm1750, %v1692, -1e+30
    %v1752 = vsel %vm1750, %v1695, -1e+30
    %v1753 = vsel %vm1750, %v1700, -1e+30
    %v1754 = vsel %vm1750, %v1703, -1e+30
    %1755 = vmax.xlane.f32.xlu0 %v1751
    %v1756 = vpop.xlane.xlu0 %1755
    %1757 = vmax.xlane.f32.xlu0 %v1752
    %v1758 = vpop.xlane.xlu0 %1757
    %1759 = vmax.xlane.f32.xlu0 %v1753
    %v1760 = vpop.xlane.xlu0 %1759
    %1761 = vmax.xlane.f32.xlu0 %v1754
    %v1762 = vpop.xlane.xlu0 %1761
    %v1763 = vsub.f32 %v1751, %v1756
    %v1764 = vsub.f32 %v1752, %v1758
    %v1765 = vsub.f32 %v1753, %v1760
    %v1766 = vsub.f32 %v1754, %v1762
    %v1767 = vmul.f32 %v1763, 1.442695
    %v1768 = vpow.pop %v1767
    %v1769 = vmul.f32 %v1764, 1.442695
    %v1770 = vpow.pop %v1769
    %v1771 = vmul.f32 %v1765, 1.442695
    %v1772 = vpow.pop %v1771
    %v1773 = vmul.f32 %v1766, 1.442695
    %v1774 = vpow.pop %v1773
    %v1775 = vsel %vm1750, %v1768, 0.0
    %v1776 = vsel %vm1750, %v1770, 0.0
    %v1777 = vsel %vm1750, %v1772, 0.0
    %v1778 = vsel %vm1750, %v1774, 0.0
    %1779 = vadd.xlane.f32.xlu0 %v1775
    %v1780 = vpop.xlane.xlu0 %1779
    %1781 = vadd.xlane.f32.xlu0 %v1776
    %v1782 = vpop.xlane.xlu0 %1781
    %1783 = vadd.xlane.f32.xlu0 %v1777
    %v1784 = vpop.xlane.xlu0 %1783
    %1785 = vadd.xlane.f32.xlu0 %v1778
    %v1786 = vpop.xlane.xlu0 %1785
    %v1787 = vrcp.pop %v1780
    %v1788 = vmul.f32 %v1775, %v1787
    %v1789 = vrcp.pop %v1782
    %v1790 = vmul.f32 %v1776, %v1789
    %v1791 = vrcp.pop %v1784
    %v1792 = vmul.f32 %v1777, %v1791
    %v1793 = vrcp.pop %v1786
    %v1794 = vmul.f32 %v1778, %v1793
    %vm1795 = vcmask 7168
    %1796 = vst.msk [vmem:[%s18] sm:$0xff] %vm1795, %v1742
    %1797 = vst.msk [vmem:[%s18 + $0x8] sm:$0xff] %vm1795, %v1743
    %1798 = vst.msk [vmem:[%s18 + $0x10] sm:$0xff] %vm1795, %v1744
    %1799 = vst.msk [vmem:[%s18 + $0x18] sm:$0xff] %vm1795, %v1745
    %1804 = vrot.lane.b32.xlu0 %v1788, 127
    %v1805 = vpop.permute.xlu0 %1804
    %1806 = vrot.lane.b32.xlu0 %v1790, 127
    %v1807 = vpop.permute.xlu0 %1806
    %1808 = vrot.lane.b32.xlu0 %v1792, 127
    %v1809 = vpop.permute.xlu0 %1808
    %1810 = vrot.lane.b32.xlu0 %v1794, 127
    %v1811 = vpop.permute.xlu0 %1810
    %vm1816 = vcmask 31744
    %1817 = vst.msk [vmem:[%s19] sm:$0xff] %vm1816, %v1805
    %1818 = vst.msk [vmem:[%s19 + $0x8] sm:$0xff] %vm1816, %v1807
    %1819 = vst.msk [vmem:[%s19 + $0x10] sm:$0xff] %vm1816, %v1809
    %1820 = vst.msk [vmem:[%s19 + $0x18] sm:$0xff] %vm1816, %v1811
    // Predicated region
    $region98: #{tpu_custom_call.1} parent=1 // pred_check
      _
    $region99: #{tpu_custom_call.1} parent=1 // pred_check_branch
      %1822 = sbr.rel (0) target = $region101
    $region100: #{tpu_custom_call.1} parent=1 // pred_region
      %s1824 = ssub.s32 1024, 1024
      %1825 = vsyncadd [#allocation4], %s1824
      %s1826 = sshll.u32 [#allocation14], 4
      %s1827 = int_to_ptr.vmem [resolvable:$true] %s1826
      %1832 = dma.vmem_to_hbm [thread:$0]  %s1827, 1024, %s17, [#allocation4], 256, 256, 16
    $region101: #{tpu_custom_call.1} parent=1 // pred_fallthru
      _
    // Predicated region
    $region102: #{tpu_custom_call.1} parent=1 // pred_check
      _
    $region103: #{tpu_custom_call.1} parent=1 // pred_check_branch
      %1834 = sbr.rel (0) target = $region105
    $region104: #{tpu_custom_call.1} parent=1 // pred_region
      _
    $region105: #{tpu_custom_call.1} parent=1 // pred_fallthru
      _
    // Predicated region
    $region106: #{tpu_custom_call.1} parent=1 // pred_check
      _
    $region107: #{tpu_custom_call.1} parent=1 // pred_check_branch
      %1836 = sbr.rel (0) target = $region109
    $region108: #{tpu_custom_call.1} parent=1 // pred_region
      _
    $region109: #{tpu_custom_call.1} parent=1 // pred_fallthru
      _
    // Predicated region
    $region110: #{tpu_custom_call.1} parent=1 // pred_check
      _
    $region111: #{tpu_custom_call.1} parent=1 // pred_check_branch
      %1838 = sbr.rel (0) target = $region113
    $region112: #{tpu_custom_call.1} parent=1 // pred_region
      %1839 = dma.done [#allocation4], 1024
    $region113: #{tpu_custom_call.1} parent=1 // pred_fallthru
      _
    // Predicated region
    $region114: #{tpu_custom_call.1} parent=1 // pred_check
      _
    $region115: #{tpu_custom_call.1} parent=1 // pred_check_branch
      %1841 = sbr.rel (0) target = $region117
    $region116: #{tpu_custom_call.1} parent=1 // pred_region
      _
    $region117: #{tpu_custom_call.1} parent=1 // pred_fallthru
      _
    // Predicated region
    $region118: #{tpu_custom_call.1} parent=1 // pred_check
      _
    $region119: #{tpu_custom_call.1} parent=1 // pred_check_branch
      %1843 = sbr.rel (0) target = $region121
    $region120: #{tpu_custom_call.1} parent=1 // pred_region
      _
    $region121: #{tpu_custom_call.1} parent=1 // pred_fallthru
      _
    %1844 = vsyncpa [#allocation3], 1
    %1845 = vsyncpa [#allocation6], 1
    %1846 = vsyncpa [#allocation9], 1
    %1847 = vsyncpa [#allocation12], 1
    %1848 = vsyncpa [#allocation4], 1

</llo_original>
